<compile_context>
chip_gen: v7x
topology: tpu7x:2x2x1
jax: 0.10.0
libtpu: 0.0.40
codegen_flags: <defaults>
</compile_context>

<pallas_src>
import functools

import jax
import jax.numpy as jnp
from jax.experimental import pallas as pl
from jax.experimental.pallas import tpu as pltpu


def _round_up(x, m):
    return (x + m - 1) // m * m


def _vpe_gather_kernel(idx_smem, w_hbm, out_ref, sem, *, tile_n, total_vocab):
    """Gather one token tile's embedding rows straight from HBM into out_ref.

    idx_smem : SMEM (n_pad,) int32       -- scalar-prefetched global token ids
    w_hbm    : HBM  (total_vocab, E)     -- concatenated per-rank weight shards
    out_ref  : VMEM (tile_n, E)          -- output block for this token tile
    sem      : DMA semaphore, shape (1,) -- shared by all row copies
    """
    t = pl.program_id(0)
    base = t * tile_n
    e = out_ref.shape[1]

    # Hoisted zero row (JAX does not CSE broadcast_in_dim inside the loop).
    zero_row = jnp.zeros((1, e), out_ref.dtype)

    # Phase 1: issue one row DMA per in-range token (directly into the output
    # block); write a zero row for masked / padded tokens.  Count the DMAs.
    def issue(i, count):
        g = idx_smem[base + i]
        in_range = jnp.logical_and(g >= 0, g < total_vocab)
        row = jnp.where(in_range, g, 0)

        @pl.when(in_range)
        def _():
            pltpu.make_async_copy(
                w_hbm.at[pl.ds(row, 1), :],
                out_ref.at[pl.ds(i, 1), :],
                sem.at[0],
            ).start()

        @pl.when(jnp.logical_not(in_range))
        def _():
            # Masked token: output_parallel[mask, :] = 0 on every rank.
            out_ref[pl.ds(i, 1), :] = zero_row

        return count + in_range.astype(jnp.int32)

    count = jax.lax.fori_loop(0, tile_n, issue, jnp.int32(0), unroll=True)

    # Phase 2: drain exactly `count` completions.  Every row copy has the same
    # byte count and shares one semaphore, so `count` equal-sized waits
    # guarantee all rows are resident before the kernel body ends (and hence
    # before the pipeline writes the output block back to HBM).  No SMEM reads
    # are interleaved with the waits.
    def drain(i, carry):
        @pl.when(i < count)
        def _():
            pltpu.make_async_copy(
                w_hbm.at[pl.ds(0, 1), :],
                out_ref.at[pl.ds(0, 1), :],
                sem.at[0],
            ).wait()

        return carry

    jax.lax.fori_loop(0, tile_n, drain, 0, unroll=True)


def vocab_parallel_embedding(indices, weight_parts, *, tile_n=128):
    """indices: int32 (B, S); weight_parts: (TP, V_per_part, E)."""
    b, s = indices.shape
    tp, v_p, e = weight_parts.shape
    total_vocab = tp * v_p
    n = b * s

    # Concatenating the per-rank shards along the vocab dim reproduces the
    # master table; masked local lookups summed over ranks == one gather here.
    w_full = weight_parts.reshape(total_vocab, e)

    # Token tiling: sublane-aligned, capped at `tile_n` tokens per grid step.
    tile_n = min(tile_n, _round_up(n, 8))
    n_pad = _round_up(n, tile_n)
    n_tiles = n_pad // tile_n

    idx_flat = indices.reshape(n).astype(jnp.int32)
    if n_pad != n:
        # Pad with -1: out of range -> zero row, no DMA; sliced off below.
        idx_flat = jnp.concatenate(
            [idx_flat, jnp.full((n_pad - n,), -1, jnp.int32)])

    kernel = functools.partial(
        _vpe_gather_kernel, tile_n=tile_n, total_vocab=total_vocab)

    itemsize = jnp.dtype(weight_parts.dtype).itemsize
    out = pl.pallas_call(
        kernel,
        out_shape=jax.ShapeDtypeStruct((n_pad, e), weight_parts.dtype),
        grid_spec=pltpu.PrefetchScalarGridSpec(
            num_scalar_prefetch=1,                        # token ids -> SMEM
            grid=(n_tiles,),
            in_specs=[pl.BlockSpec(memory_space=pl.ANY)],  # weight stays in HBM
            out_specs=pl.BlockSpec((tile_n, e), lambda t, idx: (t, 0)),
            scratch_shapes=[
                pltpu.SemaphoreType.DMA((1,)),
            ],
        ),
        compiler_params=pltpu.CompilerParams(
            dimension_semantics=("parallel",)),            # token tiles across TCs
        cost_estimate=pl.CostEstimate(
            flops=0,
            transcendentals=0,
            bytes_accessed=2 * n_pad * e * itemsize + n_pad * 4),
    )(idx_flat, w_full)

    return out[:n].reshape(b, s, e)


if __name__ == "__main__":
    # Module config (small, synthetic)
    num_embeddings = 128      # global vocab size
    embedding_dim = 32        # hidden size
    tp_size = 2               # simulated tensor_model_parallel_size
    batch, seq = 2, 8

    assert num_embeddings % tp_size == 0
    v_per_part = num_embeddings // tp_size

    key = jax.random.PRNGKey(0)
    k_w, k_idx = jax.random.split(key)

    # xavier_normal_ on the master weight (num_embeddings, embedding_dim),
    # then split along the vocab dim into TP partitions
    # (matches _initialize_affine_weight_cpu).
    xavier_std = (2.0 / (num_embeddings + embedding_dim)) ** 0.5
    master_weight = (jax.random.normal(k_w, (num_embeddings, embedding_dim),
                                       jnp.float32) * xavier_std)
    weight_parts = master_weight.reshape(tp_size, v_per_part, embedding_dim)

    indices = jax.random.randint(k_idx, (batch, seq), 0, num_embeddings,
                                 dtype=jnp.int32)

    out = vocab_parallel_embedding(indices, weight_parts)
    out = jax.block_until_ready(out)

    # Pure-JAX reference of the full forward (mask + lookup + zero + all-reduce sum).
    ref = jnp.zeros((batch, seq, embedding_dim), jnp.float32)
    for r in range(tp_size):
        start, end = r * v_per_part, (r + 1) * v_per_part
        mask = (indices < start) | (indices >= end)
        local = jnp.where(mask, 0, indices - start)
        part = jnp.take(weight_parts[r], local, axis=0)
        part = jnp.where(mask[..., None], 0.0, part)
        ref = ref + part

    assert out.shape == (batch, seq, embedding_dim)
    assert jnp.allclose(out, ref, atol=1e-5, rtol=1e-5), "mismatch vs reference"
    print("KERNEL_OK")
</pallas_src>

<mosaic_0001>
module attributes {stable_mosaic.version = 11 : i64} {
  func.func @_vpe_gather_kernel(%arg0: i32, %arg1: memref<16xi32, #tpu.memory_space<smem>>, %arg2: memref<128x32xf32, #tpu.memory_space<any>>, %arg3: memref<16x32xf32, #tpu.memory_space<vmem>>, %arg4: memref<1x!tpu.dma_semaphore, #tpu.memory_space<semaphore_mem>>) attributes {dimension_semantics = [#tpu.dimension_semantics<parallel>], iteration_bounds = array<i64: 1>, scalar_prefetch = 1 : i64, scratch_operands = 1 : i64, tpu.core_type = #tpu.core_type<tc>, window_params = [{}, {transform_indices = @transform_1, window_bounds = array<i64: 16, 32>}]} {
    %c16_i32 = arith.constant 16 : i32
    %0 = arith.muli %arg0, %c16_i32 : i32
    %cst = arith.constant 0.000000e+00 : f32
    %1 = vector.broadcast %cst : f32 to vector<1x32xf32>
    %c0_i32 = arith.constant 0 : i32
    %c0_i32_0 = arith.constant 0 : i32
    %2 = arith.addi %0, %c0_i32_0 : i32
    %3 = arith.index_cast %2 : i32 to index
    %4 = memref.load %arg1[%3] : memref<16xi32, #tpu.memory_space<smem>>
    %c0_i32_1 = arith.constant 0 : i32
    %5 = arith.cmpi sge, %4, %c0_i32_1 : i32
    %c128_i32 = arith.constant 128 : i32
    %6 = arith.cmpi slt, %4, %c128_i32 : i32
    %7 = arith.andi %5, %6 : i1
    %c0_i32_2 = arith.constant 0 : i32
    %8 = arith.select %7, %4, %c0_i32_2 : i32
    %9 = arith.extui %7 : i1 to i32
    %c0_i32_3 = arith.constant 0 : i32
    %10 = arith.cmpi ne, %9, %c0_i32_3 : i32
    scf.if %10 {
      %c0_i32_129 = arith.constant 0 : i32
      %c0_i32_130 = arith.constant 0 : i32
      %274 = tpu.memref_slice %arg2[%8, %c0_i32_130] : memref<128x32xf32, #tpu.memory_space<any>> -> memref<1x32xf32, #tpu.memory_space<any>>
      %c0_i32_131 = arith.constant 0 : i32
      %275 = tpu.memref_slice %arg3[%c0_i32_0, %c0_i32_131] : memref<16x32xf32, #tpu.memory_space<vmem>> -> memref<1x32xf32, #tpu.memory_space<vmem>>
      %276 = tpu.memref_slice %arg4[%c0_i32_129] : memref<1x!tpu.dma_semaphore, #tpu.memory_space<semaphore_mem>> -> memref<1x!tpu.dma_semaphore, #tpu.memory_space<semaphore_mem>>
      %277 = tpu.memref_squeeze %276 : memref<1x!tpu.dma_semaphore, #tpu.memory_space<semaphore_mem>> -> memref<!tpu.dma_semaphore, #tpu.memory_space<semaphore_mem>>
      tpu.enqueue_dma source(%274 : memref<1x32xf32, #tpu.memory_space<any>>) target(%275 : memref<1x32xf32, #tpu.memory_space<vmem>>) target_semaphore(%277 : memref<!tpu.dma_semaphore, #tpu.memory_space<semaphore_mem>>)
    } else {
    }
    %true = arith.constant true
    %11 = arith.xori %7, %true : i1
    %12 = arith.extui %11 : i1 to i32
    %c0_i32_4 = arith.constant 0 : i32
    %13 = arith.cmpi ne, %12, %c0_i32_4 : i32
    scf.if %13 {
      %274 = arith.index_cast %c0_i32_0 : i32 to index
      %c0 = arith.constant 0 : index
      %275 = vector.load %arg3[%274, %c0] : memref<16x32xf32, #tpu.memory_space<vmem>>, vector<1x32xf32>
      tpu.vector_store %arg3[%274, %c0], %1 {strides = array<i32>} : memref<16x32xf32, #tpu.memory_space<vmem>>, vector<1x32xf32>,
    } else {
    }
    %14 = arith.extui %7 : i1 to i32
    %15 = arith.addi %c0_i32, %14 : i32
    %c1_i32 = arith.constant 1 : i32
    %16 = arith.addi %0, %c1_i32 : i32
    %17 = arith.index_cast %16 : i32 to index
    %18 = memref.load %arg1[%17] : memref<16xi32, #tpu.memory_space<smem>>
    %c0_i32_5 = arith.constant 0 : i32
    %19 = arith.cmpi sge, %18, %c0_i32_5 : i32
    %c128_i32_6 = arith.constant 128 : i32
    %20 = arith.cmpi slt, %18, %c128_i32_6 : i32
    %21 = arith.andi %19, %20 : i1
    %c0_i32_7 = arith.constant 0 : i32
    %22 = arith.select %21, %18, %c0_i32_7 : i32
    %23 = arith.extui %21 : i1 to i32
    %c0_i32_8 = arith.constant 0 : i32
    %24 = arith.cmpi ne, %23, %c0_i32_8 : i32
    scf.if %24 {
      %c0_i32_129 = arith.constant 0 : i32
      %c0_i32_130 = arith.constant 0 : i32
      %274 = tpu.memref_slice %arg2[%22, %c0_i32_130] : memref<128x32xf32, #tpu.memory_space<any>> -> memref<1x32xf32, #tpu.memory_space<any>>
      %c0_i32_131 = arith.constant 0 : i32
      %275 = tpu.memref_slice %arg3[%c1_i32, %c0_i32_131] : memref<16x32xf32, #tpu.memory_space<vmem>> -> memref<1x32xf32, #tpu.memory_space<vmem>>
      %276 = tpu.memref_slice %arg4[%c0_i32_129] : memref<1x!tpu.dma_semaphore, #tpu.memory_space<semaphore_mem>> -> memref<1x!tpu.dma_semaphore, #tpu.memory_space<semaphore_mem>>
      %277 = tpu.memref_squeeze %276 : memref<1x!tpu.dma_semaphore, #tpu.memory_space<semaphore_mem>> -> memref<!tpu.dma_semaphore, #tpu.memory_space<semaphore_mem>>
      tpu.enqueue_dma source(%274 : memref<1x32xf32, #tpu.memory_space<any>>) target(%275 : memref<1x32xf32, #tpu.memory_space<vmem>>) target_semaphore(%277 : memref<!tpu.dma_semaphore, #tpu.memory_space<semaphore_mem>>)
    } else {
    }
    %true_9 = arith.constant true
    %25 = arith.xori %21, %true_9 : i1
    %26 = arith.extui %25 : i1 to i32
    %c0_i32_10 = arith.constant 0 : i32
    %27 = arith.cmpi ne, %26, %c0_i32_10 : i32
    scf.if %27 {
      %274 = arith.index_cast %c1_i32 : i32 to index
      %c0 = arith.constant 0 : index
      %275 = vector.load %arg3[%274, %c0] : memref<16x32xf32, #tpu.memory_space<vmem>>, vector<1x32xf32>
      tpu.vector_store %arg3[%274, %c0], %1 {strides = array<i32>} : memref<16x32xf32, #tpu.memory_space<vmem>>, vector<1x32xf32>,
    } else {
    }
    %28 = arith.extui %21 : i1 to i32
    %29 = arith.addi %15, %28 : i32
    %c2_i32 = arith.constant 2 : i32
    %30 = arith.addi %0, %c2_i32 : i32
    %31 = arith.index_cast %30 : i32 to index
    %32 = memref.load %arg1[%31] : memref<16xi32, #tpu.memory_space<smem>>
    %c0_i32_11 = arith.constant 0 : i32
    %33 = arith.cmpi sge, %32, %c0_i32_11 : i32
    %c128_i32_12 = arith.constant 128 : i32
    %34 = arith.cmpi slt, %32, %c128_i32_12 : i32
    %35 = arith.andi %33, %34 : i1
    %c0_i32_13 = arith.constant 0 : i32
    %36 = arith.select %35, %32, %c0_i32_13 : i32
    %37 = arith.extui %35 : i1 to i32
    %c0_i32_14 = arith.constant 0 : i32
    %38 = arith.cmpi ne, %37, %c0_i32_14 : i32
    scf.if %38 {
      %c0_i32_129 = arith.constant 0 : i32
      %c0_i32_130 = arith.constant 0 : i32
      %274 = tpu.memref_slice %arg2[%36, %c0_i32_130] : memref<128x32xf32, #tpu.memory_space<any>> -> memref<1x32xf32, #tpu.memory_space<any>>
      %c0_i32_131 = arith.constant 0 : i32
      %275 = tpu.memref_slice %arg3[%c2_i32, %c0_i32_131] : memref<16x32xf32, #tpu.memory_space<vmem>> -> memref<1x32xf32, #tpu.memory_space<vmem>>
      %276 = tpu.memref_slice %arg4[%c0_i32_129] : memref<1x!tpu.dma_semaphore, #tpu.memory_space<semaphore_mem>> -> memref<1x!tpu.dma_semaphore, #tpu.memory_space<semaphore_mem>>
      %277 = tpu.memref_squeeze %276 : memref<1x!tpu.dma_semaphore, #tpu.memory_space<semaphore_mem>> -> memref<!tpu.dma_semaphore, #tpu.memory_space<semaphore_mem>>
      tpu.enqueue_dma source(%274 : memref<1x32xf32, #tpu.memory_space<any>>) target(%275 : memref<1x32xf32, #tpu.memory_space<vmem>>) target_semaphore(%277 : memref<!tpu.dma_semaphore, #tpu.memory_space<semaphore_mem>>)
    } else {
    }
    %true_15 = arith.constant true
    %39 = arith.xori %35, %true_15 : i1
    %40 = arith.extui %39 : i1 to i32
    %c0_i32_16 = arith.constant 0 : i32
    %41 = arith.cmpi ne, %40, %c0_i32_16 : i32
    scf.if %41 {
      %274 = arith.index_cast %c2_i32 : i32 to index
      %c0 = arith.constant 0 : index
      %275 = vector.load %arg3[%274, %c0] : memref<16x32xf32, #tpu.memory_space<vmem>>, vector<1x32xf32>
      tpu.vector_store %arg3[%274, %c0], %1 {strides = array<i32>} : memref<16x32xf32, #tpu.memory_space<vmem>>, vector<1x32xf32>,
    } else {
    }
    %42 = arith.extui %35 : i1 to i32
    %43 = arith.addi %29, %42 : i32
    %c3_i32 = arith.constant 3 : i32
    %44 = arith.addi %0, %c3_i32 : i32
    %45 = arith.index_cast %44 : i32 to index
    %46 = memref.load %arg1[%45] : memref<16xi32, #tpu.memory_space<smem>>
    %c0_i32_17 = arith.constant 0 : i32
    %47 = arith.cmpi sge, %46, %c0_i32_17 : i32
    %c128_i32_18 = arith.constant 128 : i32
    %48 = arith.cmpi slt, %46, %c128_i32_18 : i32
    %49 = arith.andi %47, %48 : i1
    %c0_i32_19 = arith.constant 0 : i32
    %50 = arith.select %49, %46, %c0_i32_19 : i32
    %51 = arith.extui %49 : i1 to i32
    %c0_i32_20 = arith.constant 0 : i32
    %52 = arith.cmpi ne, %51, %c0_i32_20 : i32
    scf.if %52 {
      %c0_i32_129 = arith.constant 0 : i32
      %c0_i32_130 = arith.constant 0 : i32
      %274 = tpu.memref_slice %arg2[%50, %c0_i32_130] : memref<128x32xf32, #tpu.memory_space<any>> -> memref<1x32xf32, #tpu.memory_space<any>>
      %c0_i32_131 = arith.constant 0 : i32
      %275 = tpu.memref_slice %arg3[%c3_i32, %c0_i32_131] : memref<16x32xf32, #tpu.memory_space<vmem>> -> memref<1x32xf32, #tpu.memory_space<vmem>>
      %276 = tpu.memref_slice %arg4[%c0_i32_129] : memref<1x!tpu.dma_semaphore, #tpu.memory_space<semaphore_mem>> -> memref<1x!tpu.dma_semaphore, #tpu.memory_space<semaphore_mem>>
      %277 = tpu.memref_squeeze %276 : memref<1x!tpu.dma_semaphore, #tpu.memory_space<semaphore_mem>> -> memref<!tpu.dma_semaphore, #tpu.memory_space<semaphore_mem>>
      tpu.enqueue_dma source(%274 : memref<1x32xf32, #tpu.memory_space<any>>) target(%275 : memref<1x32xf32, #tpu.memory_space<vmem>>) target_semaphore(%277 : memref<!tpu.dma_semaphore, #tpu.memory_space<semaphore_mem>>)
    } else {
    }
    %true_21 = arith.constant true
    %53 = arith.xori %49, %true_21 : i1
    %54 = arith.extui %53 : i1 to i32
    %c0_i32_22 = arith.constant 0 : i32
    %55 = arith.cmpi ne, %54, %c0_i32_22 : i32
    scf.if %55 {
      %274 = arith.index_cast %c3_i32 : i32 to index
      %c0 = arith.constant 0 : index
      %275 = vector.load %arg3[%274, %c0] : memref<16x32xf32, #tpu.memory_space<vmem>>, vector<1x32xf32>
      tpu.vector_store %arg3[%274, %c0], %1 {strides = array<i32>} : memref<16x32xf32, #tpu.memory_space<vmem>>, vector<1x32xf32>,
    } else {
    }
    %56 = arith.extui %49 : i1 to i32
    %57 = arith.addi %43, %56 : i32
    %c4_i32 = arith.constant 4 : i32
    %58 = arith.addi %0, %c4_i32 : i32
    %59 = arith.index_cast %58 : i32 to index
    %60 = memref.load %arg1[%59] : memref<16xi32, #tpu.memory_space<smem>>
    %c0_i32_23 = arith.constant 0 : i32
    %61 = arith.cmpi sge, %60, %c0_i32_23 : i32
    %c128_i32_24 = arith.constant 128 : i32
    %62 = arith.cmpi slt, %60, %c128_i32_24 : i32
    %63 = arith.andi %61, %62 : i1
    %c0_i32_25 = arith.constant 0 : i32
    %64 = arith.select %63, %60, %c0_i32_25 : i32
    %65 = arith.extui %63 : i1 to i32
    %c0_i32_26 = arith.constant 0 : i32
    %66 = arith.cmpi ne, %65, %c0_i32_26 : i32
    scf.if %66 {
      %c0_i32_129 = arith.constant 0 : i32
      %c0_i32_130 = arith.constant 0 : i32
      %274 = tpu.memref_slice %arg2[%64, %c0_i32_130] : memref<128x32xf32, #tpu.memory_space<any>> -> memref<1x32xf32, #tpu.memory_space<any>>
      %c0_i32_131 = arith.constant 0 : i32
      %275 = tpu.memref_slice %arg3[%c4_i32, %c0_i32_131] : memref<16x32xf32, #tpu.memory_space<vmem>> -> memref<1x32xf32, #tpu.memory_space<vmem>>
      %276 = tpu.memref_slice %arg4[%c0_i32_129] : memref<1x!tpu.dma_semaphore, #tpu.memory_space<semaphore_mem>> -> memref<1x!tpu.dma_semaphore, #tpu.memory_space<semaphore_mem>>
      %277 = tpu.memref_squeeze %276 : memref<1x!tpu.dma_semaphore, #tpu.memory_space<semaphore_mem>> -> memref<!tpu.dma_semaphore, #tpu.memory_space<semaphore_mem>>
      tpu.enqueue_dma source(%274 : memref<1x32xf32, #tpu.memory_space<any>>) target(%275 : memref<1x32xf32, #tpu.memory_space<vmem>>) target_semaphore(%277 : memref<!tpu.dma_semaphore, #tpu.memory_space<semaphore_mem>>)
    } else {
    }
    %true_27 = arith.constant true
    %67 = arith.xori %63, %true_27 : i1
    %68 = arith.extui %67 : i1 to i32
    %c0_i32_28 = arith.constant 0 : i32
    %69 = arith.cmpi ne, %68, %c0_i32_28 : i32
    scf.if %69 {
      %274 = arith.index_cast %c4_i32 : i32 to index
      %c0 = arith.constant 0 : index
      %275 = vector.load %arg3[%274, %c0] : memref<16x32xf32, #tpu.memory_space<vmem>>, vector<1x32xf32>
      tpu.vector_store %arg3[%274, %c0], %1 {strides = array<i32>} : memref<16x32xf32, #tpu.memory_space<vmem>>, vector<1x32xf32>,
    } else {
    }
    %70 = arith.extui %63 : i1 to i32
    %71 = arith.addi %57, %70 : i32
    %c5_i32 = arith.constant 5 : i32
    %72 = arith.addi %0, %c5_i32 : i32
    %73 = arith.index_cast %72 : i32 to index
    %74 = memref.load %arg1[%73] : memref<16xi32, #tpu.memory_space<smem>>
    %c0_i32_29 = arith.constant 0 : i32
    %75 = arith.cmpi sge, %74, %c0_i32_29 : i32
    %c128_i32_30 = arith.constant 128 : i32
    %76 = arith.cmpi slt, %74, %c128_i32_30 : i32
    %77 = arith.andi %75, %76 : i1
    %c0_i32_31 = arith.constant 0 : i32
    %78 = arith.select %77, %74, %c0_i32_31 : i32
    %79 = arith.extui %77 : i1 to i32
    %c0_i32_32 = arith.constant 0 : i32
    %80 = arith.cmpi ne, %79, %c0_i32_32 : i32
    scf.if %80 {
      %c0_i32_129 = arith.constant 0 : i32
      %c0_i32_130 = arith.constant 0 : i32
      %274 = tpu.memref_slice %arg2[%78, %c0_i32_130] : memref<128x32xf32, #tpu.memory_space<any>> -> memref<1x32xf32, #tpu.memory_space<any>>
      %c0_i32_131 = arith.constant 0 : i32
      %275 = tpu.memref_slice %arg3[%c5_i32, %c0_i32_131] : memref<16x32xf32, #tpu.memory_space<vmem>> -> memref<1x32xf32, #tpu.memory_space<vmem>>
      %276 = tpu.memref_slice %arg4[%c0_i32_129] : memref<1x!tpu.dma_semaphore, #tpu.memory_space<semaphore_mem>> -> memref<1x!tpu.dma_semaphore, #tpu.memory_space<semaphore_mem>>
      %277 = tpu.memref_squeeze %276 : memref<1x!tpu.dma_semaphore, #tpu.memory_space<semaphore_mem>> -> memref<!tpu.dma_semaphore, #tpu.memory_space<semaphore_mem>>
      tpu.enqueue_dma source(%274 : memref<1x32xf32, #tpu.memory_space<any>>) target(%275 : memref<1x32xf32, #tpu.memory_space<vmem>>) target_semaphore(%277 : memref<!tpu.dma_semaphore, #tpu.memory_space<semaphore_mem>>)
    } else {
    }
    %true_33 = arith.constant true
    %81 = arith.xori %77, %true_33 : i1
    %82 = arith.extui %81 : i1 to i32
    %c0_i32_34 = arith.constant 0 : i32
    %83 = arith.cmpi ne, %82, %c0_i32_34 : i32
    scf.if %83 {
      %274 = arith.index_cast %c5_i32 : i32 to index
      %c0 = arith.constant 0 : index
      %275 = vector.load %arg3[%274, %c0] : memref<16x32xf32, #tpu.memory_space<vmem>>, vector<1x32xf32>
      tpu.vector_store %arg3[%274, %c0], %1 {strides = array<i32>} : memref<16x32xf32, #tpu.memory_space<vmem>>, vector<1x32xf32>,
    } else {
    }
    %84 = arith.extui %77 : i1 to i32
    %85 = arith.addi %71, %84 : i32
    %c6_i32 = arith.constant 6 : i32
    %86 = arith.addi %0, %c6_i32 : i32
    %87 = arith.index_cast %86 : i32 to index
    %88 = memref.load %arg1[%87] : memref<16xi32, #tpu.memory_space<smem>>
    %c0_i32_35 = arith.constant 0 : i32
    %89 = arith.cmpi sge, %88, %c0_i32_35 : i32
    %c128_i32_36 = arith.constant 128 : i32
    %90 = arith.cmpi slt, %88, %c128_i32_36 : i32
    %91 = arith.andi %89, %90 : i1
    %c0_i32_37 = arith.constant 0 : i32
    %92 = arith.select %91, %88, %c0_i32_37 : i32
    %93 = arith.extui %91 : i1 to i32
    %c0_i32_38 = arith.constant 0 : i32
    %94 = arith.cmpi ne, %93, %c0_i32_38 : i32
    scf.if %94 {
      %c0_i32_129 = arith.constant 0 : i32
      %c0_i32_130 = arith.constant 0 : i32
      %274 = tpu.memref_slice %arg2[%92, %c0_i32_130] : memref<128x32xf32, #tpu.memory_space<any>> -> memref<1x32xf32, #tpu.memory_space<any>>
      %c0_i32_131 = arith.constant 0 : i32
      %275 = tpu.memref_slice %arg3[%c6_i32, %c0_i32_131] : memref<16x32xf32, #tpu.memory_space<vmem>> -> memref<1x32xf32, #tpu.memory_space<vmem>>
      %276 = tpu.memref_slice %arg4[%c0_i32_129] : memref<1x!tpu.dma_semaphore, #tpu.memory_space<semaphore_mem>> -> memref<1x!tpu.dma_semaphore, #tpu.memory_space<semaphore_mem>>
      %277 = tpu.memref_squeeze %276 : memref<1x!tpu.dma_semaphore, #tpu.memory_space<semaphore_mem>> -> memref<!tpu.dma_semaphore, #tpu.memory_space<semaphore_mem>>
      tpu.enqueue_dma source(%274 : memref<1x32xf32, #tpu.memory_space<any>>) target(%275 : memref<1x32xf32, #tpu.memory_space<vmem>>) target_semaphore(%277 : memref<!tpu.dma_semaphore, #tpu.memory_space<semaphore_mem>>)
    } else {
    }
    %true_39 = arith.constant true
    %95 = arith.xori %91, %true_39 : i1
    %96 = arith.extui %95 : i1 to i32
    %c0_i32_40 = arith.constant 0 : i32
    %97 = arith.cmpi ne, %96, %c0_i32_40 : i32
    scf.if %97 {
      %274 = arith.index_cast %c6_i32 : i32 to index
      %c0 = arith.constant 0 : index
      %275 = vector.load %arg3[%274, %c0] : memref<16x32xf32, #tpu.memory_space<vmem>>, vector<1x32xf32>
      tpu.vector_store %arg3[%274, %c0], %1 {strides = array<i32>} : memref<16x32xf32, #tpu.memory_space<vmem>>, vector<1x32xf32>,
    } else {
    }
    %98 = arith.extui %91 : i1 to i32
    %99 = arith.addi %85, %98 : i32
    %c7_i32 = arith.constant 7 : i32
    %100 = arith.addi %0, %c7_i32 : i32
    %101 = arith.index_cast %100 : i32 to index
    %102 = memref.load %arg1[%101] : memref<16xi32, #tpu.memory_space<smem>>
    %c0_i32_41 = arith.constant 0 : i32
    %103 = arith.cmpi sge, %102, %c0_i32_41 : i32
    %c128_i32_42 = arith.constant 128 : i32
    %104 = arith.cmpi slt, %102, %c128_i32_42 : i32
    %105 = arith.andi %103, %104 : i1
    %c0_i32_43 = arith.constant 0 : i32
    %106 = arith.select %105, %102, %c0_i32_43 : i32
    %107 = arith.extui %105 : i1 to i32
    %c0_i32_44 = arith.constant 0 : i32
    %108 = arith.cmpi ne, %107, %c0_i32_44 : i32
    scf.if %108 {
      %c0_i32_129 = arith.constant 0 : i32
      %c0_i32_130 = arith.constant 0 : i32
      %274 = tpu.memref_slice %arg2[%106, %c0_i32_130] : memref<128x32xf32, #tpu.memory_space<any>> -> memref<1x32xf32, #tpu.memory_space<any>>
      %c0_i32_131 = arith.constant 0 : i32
      %275 = tpu.memref_slice %arg3[%c7_i32, %c0_i32_131] : memref<16x32xf32, #tpu.memory_space<vmem>> -> memref<1x32xf32, #tpu.memory_space<vmem>>
      %276 = tpu.memref_slice %arg4[%c0_i32_129] : memref<1x!tpu.dma_semaphore, #tpu.memory_space<semaphore_mem>> -> memref<1x!tpu.dma_semaphore, #tpu.memory_space<semaphore_mem>>
      %277 = tpu.memref_squeeze %276 : memref<1x!tpu.dma_semaphore, #tpu.memory_space<semaphore_mem>> -> memref<!tpu.dma_semaphore, #tpu.memory_space<semaphore_mem>>
      tpu.enqueue_dma source(%274 : memref<1x32xf32, #tpu.memory_space<any>>) target(%275 : memref<1x32xf32, #tpu.memory_space<vmem>>) target_semaphore(%277 : memref<!tpu.dma_semaphore, #tpu.memory_space<semaphore_mem>>)
    } else {
    }
    %true_45 = arith.constant true
    %109 = arith.xori %105, %true_45 : i1
    %110 = arith.extui %109 : i1 to i32
    %c0_i32_46 = arith.constant 0 : i32
    %111 = arith.cmpi ne, %110, %c0_i32_46 : i32
    scf.if %111 {
      %274 = arith.index_cast %c7_i32 : i32 to index
      %c0 = arith.constant 0 : index
      %275 = vector.load %arg3[%274, %c0] : memref<16x32xf32, #tpu.memory_space<vmem>>, vector<1x32xf32>
      tpu.vector_store %arg3[%274, %c0], %1 {strides = array<i32>} : memref<16x32xf32, #tpu.memory_space<vmem>>, vector<1x32xf32>,
    } else {
    }
    %112 = arith.extui %105 : i1 to i32
    %113 = arith.addi %99, %112 : i32
    %c8_i32 = arith.constant 8 : i32
    %114 = arith.addi %0, %c8_i32 : i32
    %115 = arith.index_cast %114 : i32 to index
    %116 = memref.load %arg1[%115] : memref<16xi32, #tpu.memory_space<smem>>
    %c0_i32_47 = arith.constant 0 : i32
    %117 = arith.cmpi sge, %116, %c0_i32_47 : i32
    %c128_i32_48 = arith.constant 128 : i32
    %118 = arith.cmpi slt, %116, %c128_i32_48 : i32
    %119 = arith.andi %117, %118 : i1
    %c0_i32_49 = arith.constant 0 : i32
    %120 = arith.select %119, %116, %c0_i32_49 : i32
    %121 = arith.extui %119 : i1 to i32
    %c0_i32_50 = arith.constant 0 : i32
    %122 = arith.cmpi ne, %121, %c0_i32_50 : i32
    scf.if %122 {
      %c0_i32_129 = arith.constant 0 : i32
      %c0_i32_130 = arith.constant 0 : i32
      %274 = tpu.memref_slice %arg2[%120, %c0_i32_130] : memref<128x32xf32, #tpu.memory_space<any>> -> memref<1x32xf32, #tpu.memory_space<any>>
      %c0_i32_131 = arith.constant 0 : i32
      %275 = tpu.memref_slice %arg3[%c8_i32, %c0_i32_131] : memref<16x32xf32, #tpu.memory_space<vmem>> -> memref<1x32xf32, #tpu.memory_space<vmem>>
      %276 = tpu.memref_slice %arg4[%c0_i32_129] : memref<1x!tpu.dma_semaphore, #tpu.memory_space<semaphore_mem>> -> memref<1x!tpu.dma_semaphore, #tpu.memory_space<semaphore_mem>>
      %277 = tpu.memref_squeeze %276 : memref<1x!tpu.dma_semaphore, #tpu.memory_space<semaphore_mem>> -> memref<!tpu.dma_semaphore, #tpu.memory_space<semaphore_mem>>
      tpu.enqueue_dma source(%274 : memref<1x32xf32, #tpu.memory_space<any>>) target(%275 : memref<1x32xf32, #tpu.memory_space<vmem>>) target_semaphore(%277 : memref<!tpu.dma_semaphore, #tpu.memory_space<semaphore_mem>>)
    } else {
    }
    %true_51 = arith.constant true
    %123 = arith.xori %119, %true_51 : i1
    %124 = arith.extui %123 : i1 to i32
    %c0_i32_52 = arith.constant 0 : i32
    %125 = arith.cmpi ne, %124, %c0_i32_52 : i32
    scf.if %125 {
      %274 = arith.index_cast %c8_i32 : i32 to index
      %c0 = arith.constant 0 : index
      %275 = vector.load %arg3[%274, %c0] : memref<16x32xf32, #tpu.memory_space<vmem>>, vector<1x32xf32>
      tpu.vector_store %arg3[%274, %c0], %1 {strides = array<i32>} : memref<16x32xf32, #tpu.memory_space<vmem>>, vector<1x32xf32>,
    } else {
    }
    %126 = arith.extui %119 : i1 to i32
    %127 = arith.addi %113, %126 : i32
    %c9_i32 = arith.constant 9 : i32
    %128 = arith.addi %0, %c9_i32 : i32
    %129 = arith.index_cast %128 : i32 to index
    %130 = memref.load %arg1[%129] : memref<16xi32, #tpu.memory_space<smem>>
    %c0_i32_53 = arith.constant 0 : i32
    %131 = arith.cmpi sge, %130, %c0_i32_53 : i32
    %c128_i32_54 = arith.constant 128 : i32
    %132 = arith.cmpi slt, %130, %c128_i32_54 : i32
    %133 = arith.andi %131, %132 : i1
    %c0_i32_55 = arith.constant 0 : i32
    %134 = arith.select %133, %130, %c0_i32_55 : i32
    %135 = arith.extui %133 : i1 to i32
    %c0_i32_56 = arith.constant 0 : i32
    %136 = arith.cmpi ne, %135, %c0_i32_56 : i32
    scf.if %136 {
      %c0_i32_129 = arith.constant 0 : i32
      %c0_i32_130 = arith.constant 0 : i32
      %274 = tpu.memref_slice %arg2[%134, %c0_i32_130] : memref<128x32xf32, #tpu.memory_space<any>> -> memref<1x32xf32, #tpu.memory_space<any>>
      %c0_i32_131 = arith.constant 0 : i32
      %275 = tpu.memref_slice %arg3[%c9_i32, %c0_i32_131] : memref<16x32xf32, #tpu.memory_space<vmem>> -> memref<1x32xf32, #tpu.memory_space<vmem>>
      %276 = tpu.memref_slice %arg4[%c0_i32_129] : memref<1x!tpu.dma_semaphore, #tpu.memory_space<semaphore_mem>> -> memref<1x!tpu.dma_semaphore, #tpu.memory_space<semaphore_mem>>
      %277 = tpu.memref_squeeze %276 : memref<1x!tpu.dma_semaphore, #tpu.memory_space<semaphore_mem>> -> memref<!tpu.dma_semaphore, #tpu.memory_space<semaphore_mem>>
      tpu.enqueue_dma source(%274 : memref<1x32xf32, #tpu.memory_space<any>>) target(%275 : memref<1x32xf32, #tpu.memory_space<vmem>>) target_semaphore(%277 : memref<!tpu.dma_semaphore, #tpu.memory_space<semaphore_mem>>)
    } else {
    }
    %true_57 = arith.constant true
    %137 = arith.xori %133, %true_57 : i1
    %138 = arith.extui %137 : i1 to i32
    %c0_i32_58 = arith.constant 0 : i32
    %139 = arith.cmpi ne, %138, %c0_i32_58 : i32
    scf.if %139 {
      %274 = arith.index_cast %c9_i32 : i32 to index
      %c0 = arith.constant 0 : index
      %275 = vector.load %arg3[%274, %c0] : memref<16x32xf32, #tpu.memory_space<vmem>>, vector<1x32xf32>
      tpu.vector_store %arg3[%274, %c0], %1 {strides = array<i32>} : memref<16x32xf32, #tpu.memory_space<vmem>>, vector<1x32xf32>,
    } else {
    }
    %140 = arith.extui %133 : i1 to i32
    %141 = arith.addi %127, %140 : i32
    %c10_i32 = arith.constant 10 : i32
    %142 = arith.addi %0, %c10_i32 : i32
    %143 = arith.index_cast %142 : i32 to index
    %144 = memref.load %arg1[%143] : memref<16xi32, #tpu.memory_space<smem>>
    %c0_i32_59 = arith.constant 0 : i32
    %145 = arith.cmpi sge, %144, %c0_i32_59 : i32
    %c128_i32_60 = arith.constant 128 : i32
    %146 = arith.cmpi slt, %144, %c128_i32_60 : i32
    %147 = arith.andi %145, %146 : i1
    %c0_i32_61 = arith.constant 0 : i32
    %148 = arith.select %147, %144, %c0_i32_61 : i32
    %149 = arith.extui %147 : i1 to i32
    %c0_i32_62 = arith.constant 0 : i32
    %150 = arith.cmpi ne, %149, %c0_i32_62 : i32
    scf.if %150 {
      %c0_i32_129 = arith.constant 0 : i32
      %c0_i32_130 = arith.constant 0 : i32
      %274 = tpu.memref_slice %arg2[%148, %c0_i32_130] : memref<128x32xf32, #tpu.memory_space<any>> -> memref<1x32xf32, #tpu.memory_space<any>>
      %c0_i32_131 = arith.constant 0 : i32
      %275 = tpu.memref_slice %arg3[%c10_i32, %c0_i32_131] : memref<16x32xf32, #tpu.memory_space<vmem>> -> memref<1x32xf32, #tpu.memory_space<vmem>>
      %276 = tpu.memref_slice %arg4[%c0_i32_129] : memref<1x!tpu.dma_semaphore, #tpu.memory_space<semaphore_mem>> -> memref<1x!tpu.dma_semaphore, #tpu.memory_space<semaphore_mem>>
      %277 = tpu.memref_squeeze %276 : memref<1x!tpu.dma_semaphore, #tpu.memory_space<semaphore_mem>> -> memref<!tpu.dma_semaphore, #tpu.memory_space<semaphore_mem>>
      tpu.enqueue_dma source(%274 : memref<1x32xf32, #tpu.memory_space<any>>) target(%275 : memref<1x32xf32, #tpu.memory_space<vmem>>) target_semaphore(%277 : memref<!tpu.dma_semaphore, #tpu.memory_space<semaphore_mem>>)
    } else {
    }
    %true_63 = arith.constant true
    %151 = arith.xori %147, %true_63 : i1
    %152 = arith.extui %151 : i1 to i32
    %c0_i32_64 = arith.constant 0 : i32
    %153 = arith.cmpi ne, %152, %c0_i32_64 : i32
    scf.if %153 {
      %274 = arith.index_cast %c10_i32 : i32 to index
      %c0 = arith.constant 0 : index
      %275 = vector.load %arg3[%274, %c0] : memref<16x32xf32, #tpu.memory_space<vmem>>, vector<1x32xf32>
      tpu.vector_store %arg3[%274, %c0], %1 {strides = array<i32>} : memref<16x32xf32, #tpu.memory_space<vmem>>, vector<1x32xf32>,
    } else {
    }
    %154 = arith.extui %147 : i1 to i32
    %155 = arith.addi %141, %154 : i32
    %c11_i32 = arith.constant 11 : i32
    %156 = arith.addi %0, %c11_i32 : i32
    %157 = arith.index_cast %156 : i32 to index
    %158 = memref.load %arg1[%157] : memref<16xi32, #tpu.memory_space<smem>>
    %c0_i32_65 = arith.constant 0 : i32
    %159 = arith.cmpi sge, %158, %c0_i32_65 : i32
    %c128_i32_66 = arith.constant 128 : i32
    %160 = arith.cmpi slt, %158, %c128_i32_66 : i32
    %161 = arith.andi %159, %160 : i1
    %c0_i32_67 = arith.constant 0 : i32
    %162 = arith.select %161, %158, %c0_i32_67 : i32
    %163 = arith.extui %161 : i1 to i32
    %c0_i32_68 = arith.constant 0 : i32
    %164 = arith.cmpi ne, %163, %c0_i32_68 : i32
    scf.if %164 {
      %c0_i32_129 = arith.constant 0 : i32
      %c0_i32_130 = arith.constant 0 : i32
      %274 = tpu.memref_slice %arg2[%162, %c0_i32_130] : memref<128x32xf32, #tpu.memory_space<any>> -> memref<1x32xf32, #tpu.memory_space<any>>
      %c0_i32_131 = arith.constant 0 : i32
      %275 = tpu.memref_slice %arg3[%c11_i32, %c0_i32_131] : memref<16x32xf32, #tpu.memory_space<vmem>> -> memref<1x32xf32, #tpu.memory_space<vmem>>
      %276 = tpu.memref_slice %arg4[%c0_i32_129] : memref<1x!tpu.dma_semaphore, #tpu.memory_space<semaphore_mem>> -> memref<1x!tpu.dma_semaphore, #tpu.memory_space<semaphore_mem>>
      %277 = tpu.memref_squeeze %276 : memref<1x!tpu.dma_semaphore, #tpu.memory_space<semaphore_mem>> -> memref<!tpu.dma_semaphore, #tpu.memory_space<semaphore_mem>>
      tpu.enqueue_dma source(%274 : memref<1x32xf32, #tpu.memory_space<any>>) target(%275 : memref<1x32xf32, #tpu.memory_space<vmem>>) target_semaphore(%277 : memref<!tpu.dma_semaphore, #tpu.memory_space<semaphore_mem>>)
    } else {
    }
    %true_69 = arith.constant true
    %165 = arith.xori %161, %true_69 : i1
    %166 = arith.extui %165 : i1 to i32
    %c0_i32_70 = arith.constant 0 : i32
    %167 = arith.cmpi ne, %166, %c0_i32_70 : i32
    scf.if %167 {
      %274 = arith.index_cast %c11_i32 : i32 to index
      %c0 = arith.constant 0 : index
      %275 = vector.load %arg3[%274, %c0] : memref<16x32xf32, #tpu.memory_space<vmem>>, vector<1x32xf32>
      tpu.vector_store %arg3[%274, %c0], %1 {strides = array<i32>} : memref<16x32xf32, #tpu.memory_space<vmem>>, vector<1x32xf32>,
    } else {
    }
    %168 = arith.extui %161 : i1 to i32
    %169 = arith.addi %155, %168 : i32
    %c12_i32 = arith.constant 12 : i32
    %170 = arith.addi %0, %c12_i32 : i32
    %171 = arith.index_cast %170 : i32 to index
    %172 = memref.load %arg1[%171] : memref<16xi32, #tpu.memory_space<smem>>
    %c0_i32_71 = arith.constant 0 : i32
    %173 = arith.cmpi sge, %172, %c0_i32_71 : i32
    %c128_i32_72 = arith.constant 128 : i32
    %174 = arith.cmpi slt, %172, %c128_i32_72 : i32
    %175 = arith.andi %173, %174 : i1
    %c0_i32_73 = arith.constant 0 : i32
    %176 = arith.select %175, %172, %c0_i32_73 : i32
    %177 = arith.extui %175 : i1 to i32
    %c0_i32_74 = arith.constant 0 : i32
    %178 = arith.cmpi ne, %177, %c0_i32_74 : i32
    scf.if %178 {
      %c0_i32_129 = arith.constant 0 : i32
      %c0_i32_130 = arith.constant 0 : i32
      %274 = tpu.memref_slice %arg2[%176, %c0_i32_130] : memref<128x32xf32, #tpu.memory_space<any>> -> memref<1x32xf32, #tpu.memory_space<any>>
      %c0_i32_131 = arith.constant 0 : i32
      %275 = tpu.memref_slice %arg3[%c12_i32, %c0_i32_131] : memref<16x32xf32, #tpu.memory_space<vmem>> -> memref<1x32xf32, #tpu.memory_space<vmem>>
      %276 = tpu.memref_slice %arg4[%c0_i32_129] : memref<1x!tpu.dma_semaphore, #tpu.memory_space<semaphore_mem>> -> memref<1x!tpu.dma_semaphore, #tpu.memory_space<semaphore_mem>>
      %277 = tpu.memref_squeeze %276 : memref<1x!tpu.dma_semaphore, #tpu.memory_space<semaphore_mem>> -> memref<!tpu.dma_semaphore, #tpu.memory_space<semaphore_mem>>
      tpu.enqueue_dma source(%274 : memref<1x32xf32, #tpu.memory_space<any>>) target(%275 : memref<1x32xf32, #tpu.memory_space<vmem>>) target_semaphore(%277 : memref<!tpu.dma_semaphore, #tpu.memory_space<semaphore_mem>>)
    } else {
    }
    %true_75 = arith.constant true
    %179 = arith.xori %175, %true_75 : i1
    %180 = arith.extui %179 : i1 to i32
    %c0_i32_76 = arith.constant 0 : i32
    %181 = arith.cmpi ne, %180, %c0_i32_76 : i32
    scf.if %181 {
      %274 = arith.index_cast %c12_i32 : i32 to index
      %c0 = arith.constant 0 : index
      %275 = vector.load %arg3[%274, %c0] : memref<16x32xf32, #tpu.memory_space<vmem>>, vector<1x32xf32>
      tpu.vector_store %arg3[%274, %c0], %1 {strides = array<i32>} : memref<16x32xf32, #tpu.memory_space<vmem>>, vector<1x32xf32>,
    } else {
    }
    %182 = arith.extui %175 : i1 to i32
    %183 = arith.addi %169, %182 : i32
    %c13_i32 = arith.constant 13 : i32
    %184 = arith.addi %0, %c13_i32 : i32
    %185 = arith.index_cast %184 : i32 to index
    %186 = memref.load %arg1[%185] : memref<16xi32, #tpu.memory_space<smem>>
    %c0_i32_77 = arith.constant 0 : i32
    %187 = arith.cmpi sge, %186, %c0_i32_77 : i32
    %c128_i32_78 = arith.constant 128 : i32
    %188 = arith.cmpi slt, %186, %c128_i32_78 : i32
    %189 = arith.andi %187, %188 : i1
    %c0_i32_79 = arith.constant 0 : i32
    %190 = arith.select %189, %186, %c0_i32_79 : i32
    %191 = arith.extui %189 : i1 to i32
    %c0_i32_80 = arith.constant 0 : i32
    %192 = arith.cmpi ne, %191, %c0_i32_80 : i32
    scf.if %192 {
      %c0_i32_129 = arith.constant 0 : i32
      %c0_i32_130 = arith.constant 0 : i32
      %274 = tpu.memref_slice %arg2[%190, %c0_i32_130] : memref<128x32xf32, #tpu.memory_space<any>> -> memref<1x32xf32, #tpu.memory_space<any>>
      %c0_i32_131 = arith.constant 0 : i32
      %275 = tpu.memref_slice %arg3[%c13_i32, %c0_i32_131] : memref<16x32xf32, #tpu.memory_space<vmem>> -> memref<1x32xf32, #tpu.memory_space<vmem>>
      %276 = tpu.memref_slice %arg4[%c0_i32_129] : memref<1x!tpu.dma_semaphore, #tpu.memory_space<semaphore_mem>> -> memref<1x!tpu.dma_semaphore, #tpu.memory_space<semaphore_mem>>
      %277 = tpu.memref_squeeze %276 : memref<1x!tpu.dma_semaphore, #tpu.memory_space<semaphore_mem>> -> memref<!tpu.dma_semaphore, #tpu.memory_space<semaphore_mem>>
      tpu.enqueue_dma source(%274 : memref<1x32xf32, #tpu.memory_space<any>>) target(%275 : memref<1x32xf32, #tpu.memory_space<vmem>>) target_semaphore(%277 : memref<!tpu.dma_semaphore, #tpu.memory_space<semaphore_mem>>)
    } else {
    }
    %true_81 = arith.constant true
    %193 = arith.xori %189, %true_81 : i1
    %194 = arith.extui %193 : i1 to i32
    %c0_i32_82 = arith.constant 0 : i32
    %195 = arith.cmpi ne, %194, %c0_i32_82 : i32
    scf.if %195 {
      %274 = arith.index_cast %c13_i32 : i32 to index
      %c0 = arith.constant 0 : index
      %275 = vector.load %arg3[%274, %c0] : memref<16x32xf32, #tpu.memory_space<vmem>>, vector<1x32xf32>
      tpu.vector_store %arg3[%274, %c0], %1 {strides = array<i32>} : memref<16x32xf32, #tpu.memory_space<vmem>>, vector<1x32xf32>,
    } else {
    }
    %196 = arith.extui %189 : i1 to i32
    %197 = arith.addi %183, %196 : i32
    %c14_i32 = arith.constant 14 : i32
    %198 = arith.addi %0, %c14_i32 : i32
    %199 = arith.index_cast %198 : i32 to index
    %200 = memref.load %arg1[%199] : memref<16xi32, #tpu.memory_space<smem>>
    %c0_i32_83 = arith.constant 0 : i32
    %201 = arith.cmpi sge, %200, %c0_i32_83 : i32
    %c128_i32_84 = arith.constant 128 : i32
    %202 = arith.cmpi slt, %200, %c128_i32_84 : i32
    %203 = arith.andi %201, %202 : i1
    %c0_i32_85 = arith.constant 0 : i32
    %204 = arith.select %203, %200, %c0_i32_85 : i32
    %205 = arith.extui %203 : i1 to i32
    %c0_i32_86 = arith.constant 0 : i32
    %206 = arith.cmpi ne, %205, %c0_i32_86 : i32
    scf.if %206 {
      %c0_i32_129 = arith.constant 0 : i32
      %c0_i32_130 = arith.constant 0 : i32
      %274 = tpu.memref_slice %arg2[%204, %c0_i32_130] : memref<128x32xf32, #tpu.memory_space<any>> -> memref<1x32xf32, #tpu.memory_space<any>>
      %c0_i32_131 = arith.constant 0 : i32
      %275 = tpu.memref_slice %arg3[%c14_i32, %c0_i32_131] : memref<16x32xf32, #tpu.memory_space<vmem>> -> memref<1x32xf32, #tpu.memory_space<vmem>>
      %276 = tpu.memref_slice %arg4[%c0_i32_129] : memref<1x!tpu.dma_semaphore, #tpu.memory_space<semaphore_mem>> -> memref<1x!tpu.dma_semaphore, #tpu.memory_space<semaphore_mem>>
      %277 = tpu.memref_squeeze %276 : memref<1x!tpu.dma_semaphore, #tpu.memory_space<semaphore_mem>> -> memref<!tpu.dma_semaphore, #tpu.memory_space<semaphore_mem>>
      tpu.enqueue_dma source(%274 : memref<1x32xf32, #tpu.memory_space<any>>) target(%275 : memref<1x32xf32, #tpu.memory_space<vmem>>) target_semaphore(%277 : memref<!tpu.dma_semaphore, #tpu.memory_space<semaphore_mem>>)
    } else {
    }
    %true_87 = arith.constant true
    %207 = arith.xori %203, %true_87 : i1
    %208 = arith.extui %207 : i1 to i32
    %c0_i32_88 = arith.constant 0 : i32
    %209 = arith.cmpi ne, %208, %c0_i32_88 : i32
    scf.if %209 {
      %274 = arith.index_cast %c14_i32 : i32 to index
      %c0 = arith.constant 0 : index
      %275 = vector.load %arg3[%274, %c0] : memref<16x32xf32, #tpu.memory_space<vmem>>, vector<1x32xf32>
      tpu.vector_store %arg3[%274, %c0], %1 {strides = array<i32>} : memref<16x32xf32, #tpu.memory_space<vmem>>, vector<1x32xf32>,
    } else {
    }
    %210 = arith.extui %203 : i1 to i32
    %211 = arith.addi %197, %210 : i32
    %c15_i32 = arith.constant 15 : i32
    %212 = arith.addi %0, %c15_i32 : i32
    %213 = arith.index_cast %212 : i32 to index
    %214 = memref.load %arg1[%213] : memref<16xi32, #tpu.memory_space<smem>>
    %c0_i32_89 = arith.constant 0 : i32
    %215 = arith.cmpi sge, %214, %c0_i32_89 : i32
    %c128_i32_90 = arith.constant 128 : i32
    %216 = arith.cmpi slt, %214, %c128_i32_90 : i32
    %217 = arith.andi %215, %216 : i1
    %c0_i32_91 = arith.constant 0 : i32
    %218 = arith.select %217, %214, %c0_i32_91 : i32
    %219 = arith.extui %217 : i1 to i32
    %c0_i32_92 = arith.constant 0 : i32
    %220 = arith.cmpi ne, %219, %c0_i32_92 : i32
    scf.if %220 {
      %c0_i32_129 = arith.constant 0 : i32
      %c0_i32_130 = arith.constant 0 : i32
      %274 = tpu.memref_slice %arg2[%218, %c0_i32_130] : memref<128x32xf32, #tpu.memory_space<any>> -> memref<1x32xf32, #tpu.memory_space<any>>
      %c0_i32_131 = arith.constant 0 : i32
      %275 = tpu.memref_slice %arg3[%c15_i32, %c0_i32_131] : memref<16x32xf32, #tpu.memory_space<vmem>> -> memref<1x32xf32, #tpu.memory_space<vmem>>
      %276 = tpu.memref_slice %arg4[%c0_i32_129] : memref<1x!tpu.dma_semaphore, #tpu.memory_space<semaphore_mem>> -> memref<1x!tpu.dma_semaphore, #tpu.memory_space<semaphore_mem>>
      %277 = tpu.memref_squeeze %276 : memref<1x!tpu.dma_semaphore, #tpu.memory_space<semaphore_mem>> -> memref<!tpu.dma_semaphore, #tpu.memory_space<semaphore_mem>>
      tpu.enqueue_dma source(%274 : memref<1x32xf32, #tpu.memory_space<any>>) target(%275 : memref<1x32xf32, #tpu.memory_space<vmem>>) target_semaphore(%277 : memref<!tpu.dma_semaphore, #tpu.memory_space<semaphore_mem>>)
    } else {
    }
    %true_93 = arith.constant true
    %221 = arith.xori %217, %true_93 : i1
    %222 = arith.extui %221 : i1 to i32
    %c0_i32_94 = arith.constant 0 : i32
    %223 = arith.cmpi ne, %222, %c0_i32_94 : i32
    scf.if %223 {
      %274 = arith.index_cast %c15_i32 : i32 to index
      %c0 = arith.constant 0 : index
      %275 = vector.load %arg3[%274, %c0] : memref<16x32xf32, #tpu.memory_space<vmem>>, vector<1x32xf32>
      tpu.vector_store %arg3[%274, %c0], %1 {strides = array<i32>} : memref<16x32xf32, #tpu.memory_space<vmem>>, vector<1x32xf32>,
    } else {
    }
    %224 = arith.extui %217 : i1 to i32
    %225 = arith.addi %211, %224 : i32
    %c16_i32_95 = arith.constant 16 : i32
    %c0_i32_96 = arith.constant 0 : i32
    %226 = arith.cmpi slt, %c0_i32_96, %225 : i32
    %227 = arith.extui %226 : i1 to i32
    %c0_i32_97 = arith.constant 0 : i32
    %228 = arith.cmpi ne, %227, %c0_i32_97 : i32
    scf.if %228 {
      %c0_i32_129 = arith.constant 0 : i32
      %c0_i32_130 = arith.constant 0 : i32
      %c0_i32_131 = arith.constant 0 : i32
      %274 = tpu.memref_slice %arg2[%c0_i32_130, %c0_i32_131] : memref<128x32xf32, #tpu.memory_space<any>> -> memref<1x32xf32, #tpu.memory_space<any>>
      %c0_i32_132 = arith.constant 0 : i32
      %c0_i32_133 = arith.constant 0 : i32
      %275 = tpu.memref_slice %arg3[%c0_i32_132, %c0_i32_133] : memref<16x32xf32, #tpu.memory_space<vmem>> -> memref<1x32xf32, #tpu.memory_space<vmem>>
      %276 = tpu.memref_slice %arg4[%c0_i32_129] : memref<1x!tpu.dma_semaphore, #tpu.memory_space<semaphore_mem>> -> memref<1x!tpu.dma_semaphore, #tpu.memory_space<semaphore_mem>>
      %277 = tpu.memref_squeeze %276 : memref<1x!tpu.dma_semaphore, #tpu.memory_space<semaphore_mem>> -> memref<!tpu.dma_semaphore, #tpu.memory_space<semaphore_mem>>
      tpu.wait_dma2 semaphore(%277 : memref<!tpu.dma_semaphore, #tpu.memory_space<semaphore_mem>>) src(%274 : memref<1x32xf32, #tpu.memory_space<any>>) dst(%275 : memref<1x32xf32, #tpu.memory_space<vmem>>)
    } else {
    }
    %c1_i32_98 = arith.constant 1 : i32
    %229 = arith.cmpi slt, %c1_i32_98, %225 : i32
    %230 = arith.extui %229 : i1 to i32
    %c0_i32_99 = arith.constant 0 : i32
    %231 = arith.cmpi ne, %230, %c0_i32_99 : i32
    scf.if %231 {
      %c0_i32_129 = arith.constant 0 : i32
      %c0_i32_130 = arith.constant 0 : i32
      %c0_i32_131 = arith.constant 0 : i32
      %274 = tpu.memref_slice %arg2[%c0_i32_130, %c0_i32_131] : memref<128x32xf32, #tpu.memory_space<any>> -> memref<1x32xf32, #tpu.memory_space<any>>
      %c0_i32_132 = arith.constant 0 : i32
      %c0_i32_133 = arith.constant 0 : i32
      %275 = tpu.memref_slice %arg3[%c0_i32_132, %c0_i32_133] : memref<16x32xf32, #tpu.memory_space<vmem>> -> memref<1x32xf32, #tpu.memory_space<vmem>>
      %276 = tpu.memref_slice %arg4[%c0_i32_129] : memref<1x!tpu.dma_semaphore, #tpu.memory_space<semaphore_mem>> -> memref<1x!tpu.dma_semaphore, #tpu.memory_space<semaphore_mem>>
      %277 = tpu.memref_squeeze %276 : memref<1x!tpu.dma_semaphore, #tpu.memory_space<semaphore_mem>> -> memref<!tpu.dma_semaphore, #tpu.memory_space<semaphore_mem>>
      tpu.wait_dma2 semaphore(%277 : memref<!tpu.dma_semaphore, #tpu.memory_space<semaphore_mem>>) src(%274 : memref<1x32xf32, #tpu.memory_space<any>>) dst(%275 : memref<1x32xf32, #tpu.memory_space<vmem>>)
    } else {
    }
    %c2_i32_100 = arith.constant 2 : i32
    %232 = arith.cmpi slt, %c2_i32_100, %225 : i32
    %233 = arith.extui %232 : i1 to i32
    %c0_i32_101 = arith.constant 0 : i32
    %234 = arith.cmpi ne, %233, %c0_i32_101 : i32
    scf.if %234 {
      %c0_i32_129 = arith.constant 0 : i32
      %c0_i32_130 = arith.constant 0 : i32
      %c0_i32_131 = arith.constant 0 : i32
      %274 = tpu.memref_slice %arg2[%c0_i32_130, %c0_i32_131] : memref<128x32xf32, #tpu.memory_space<any>> -> memref<1x32xf32, #tpu.memory_space<any>>
      %c0_i32_132 = arith.constant 0 : i32
      %c0_i32_133 = arith.constant 0 : i32
      %275 = tpu.memref_slice %arg3[%c0_i32_132, %c0_i32_133] : memref<16x32xf32, #tpu.memory_space<vmem>> -> memref<1x32xf32, #tpu.memory_space<vmem>>
      %276 = tpu.memref_slice %arg4[%c0_i32_129] : memref<1x!tpu.dma_semaphore, #tpu.memory_space<semaphore_mem>> -> memref<1x!tpu.dma_semaphore, #tpu.memory_space<semaphore_mem>>
      %277 = tpu.memref_squeeze %276 : memref<1x!tpu.dma_semaphore, #tpu.memory_space<semaphore_mem>> -> memref<!tpu.dma_semaphore, #tpu.memory_space<semaphore_mem>>
      tpu.wait_dma2 semaphore(%277 : memref<!tpu.dma_semaphore, #tpu.memory_space<semaphore_mem>>) src(%274 : memref<1x32xf32, #tpu.memory_space<any>>) dst(%275 : memref<1x32xf32, #tpu.memory_space<vmem>>)
    } else {
    }
    %c3_i32_102 = arith.constant 3 : i32
    %235 = arith.cmpi slt, %c3_i32_102, %225 : i32
    %236 = arith.extui %235 : i1 to i32
    %c0_i32_103 = arith.constant 0 : i32
    %237 = arith.cmpi ne, %236, %c0_i32_103 : i32
    scf.if %237 {
      %c0_i32_129 = arith.constant 0 : i32
      %c0_i32_130 = arith.constant 0 : i32
      %c0_i32_131 = arith.constant 0 : i32
      %274 = tpu.memref_slice %arg2[%c0_i32_130, %c0_i32_131] : memref<128x32xf32, #tpu.memory_space<any>> -> memref<1x32xf32, #tpu.memory_space<any>>
      %c0_i32_132 = arith.constant 0 : i32
      %c0_i32_133 = arith.constant 0 : i32
      %275 = tpu.memref_slice %arg3[%c0_i32_132, %c0_i32_133] : memref<16x32xf32, #tpu.memory_space<vmem>> -> memref<1x32xf32, #tpu.memory_space<vmem>>
      %276 = tpu.memref_slice %arg4[%c0_i32_129] : memref<1x!tpu.dma_semaphore, #tpu.memory_space<semaphore_mem>> -> memref<1x!tpu.dma_semaphore, #tpu.memory_space<semaphore_mem>>
      %277 = tpu.memref_squeeze %276 : memref<1x!tpu.dma_semaphore, #tpu.memory_space<semaphore_mem>> -> memref<!tpu.dma_semaphore, #tpu.memory_space<semaphore_mem>>
      tpu.wait_dma2 semaphore(%277 : memref<!tpu.dma_semaphore, #tpu.memory_space<semaphore_mem>>) src(%274 : memref<1x32xf32, #tpu.memory_space<any>>) dst(%275 : memref<1x32xf32, #tpu.memory_space<vmem>>)
    } else {
    }
    %c4_i32_104 = arith.constant 4 : i32
    %238 = arith.cmpi slt, %c4_i32_104, %225 : i32
    %239 = arith.extui %238 : i1 to i32
    %c0_i32_105 = arith.constant 0 : i32
    %240 = arith.cmpi ne, %239, %c0_i32_105 : i32
    scf.if %240 {
      %c0_i32_129 = arith.constant 0 : i32
      %c0_i32_130 = arith.constant 0 : i32
      %c0_i32_131 = arith.constant 0 : i32
      %274 = tpu.memref_slice %arg2[%c0_i32_130, %c0_i32_131] : memref<128x32xf32, #tpu.memory_space<any>> -> memref<1x32xf32, #tpu.memory_space<any>>
      %c0_i32_132 = arith.constant 0 : i32
      %c0_i32_133 = arith.constant 0 : i32
      %275 = tpu.memref_slice %arg3[%c0_i32_132, %c0_i32_133] : memref<16x32xf32, #tpu.memory_space<vmem>> -> memref<1x32xf32, #tpu.memory_space<vmem>>
      %276 = tpu.memref_slice %arg4[%c0_i32_129] : memref<1x!tpu.dma_semaphore, #tpu.memory_space<semaphore_mem>> -> memref<1x!tpu.dma_semaphore, #tpu.memory_space<semaphore_mem>>
      %277 = tpu.memref_squeeze %276 : memref<1x!tpu.dma_semaphore, #tpu.memory_space<semaphore_mem>> -> memref<!tpu.dma_semaphore, #tpu.memory_space<semaphore_mem>>
      tpu.wait_dma2 semaphore(%277 : memref<!tpu.dma_semaphore, #tpu.memory_space<semaphore_mem>>) src(%274 : memref<1x32xf32, #tpu.memory_space<any>>) dst(%275 : memref<1x32xf32, #tpu.memory_space<vmem>>)
    } else {
    }
    %c5_i32_106 = arith.constant 5 : i32
    %241 = arith.cmpi slt, %c5_i32_106, %225 : i32
    %242 = arith.extui %241 : i1 to i32
    %c0_i32_107 = arith.constant 0 : i32
    %243 = arith.cmpi ne, %242, %c0_i32_107 : i32
    scf.if %243 {
      %c0_i32_129 = arith.constant 0 : i32
      %c0_i32_130 = arith.constant 0 : i32
      %c0_i32_131 = arith.constant 0 : i32
      %274 = tpu.memref_slice %arg2[%c0_i32_130, %c0_i32_131] : memref<128x32xf32, #tpu.memory_space<any>> -> memref<1x32xf32, #tpu.memory_space<any>>
      %c0_i32_132 = arith.constant 0 : i32
      %c0_i32_133 = arith.constant 0 : i32
      %275 = tpu.memref_slice %arg3[%c0_i32_132, %c0_i32_133] : memref<16x32xf32, #tpu.memory_space<vmem>> -> memref<1x32xf32, #tpu.memory_space<vmem>>
      %276 = tpu.memref_slice %arg4[%c0_i32_129] : memref<1x!tpu.dma_semaphore, #tpu.memory_space<semaphore_mem>> -> memref<1x!tpu.dma_semaphore, #tpu.memory_space<semaphore_mem>>
      %277 = tpu.memref_squeeze %276 : memref<1x!tpu.dma_semaphore, #tpu.memory_space<semaphore_mem>> -> memref<!tpu.dma_semaphore, #tpu.memory_space<semaphore_mem>>
      tpu.wait_dma2 semaphore(%277 : memref<!tpu.dma_semaphore, #tpu.memory_space<semaphore_mem>>) src(%274 : memref<1x32xf32, #tpu.memory_space<any>>) dst(%275 : memref<1x32xf32, #tpu.memory_space<vmem>>)
    } else {
    }
    %c6_i32_108 = arith.constant 6 : i32
    %244 = arith.cmpi slt, %c6_i32_108, %225 : i32
    %245 = arith.extui %244 : i1 to i32
    %c0_i32_109 = arith.constant 0 : i32
    %246 = arith.cmpi ne, %245, %c0_i32_109 : i32
    scf.if %246 {
      %c0_i32_129 = arith.constant 0 : i32
      %c0_i32_130 = arith.constant 0 : i32
      %c0_i32_131 = arith.constant 0 : i32
      %274 = tpu.memref_slice %arg2[%c0_i32_130, %c0_i32_131] : memref<128x32xf32, #tpu.memory_space<any>> -> memref<1x32xf32, #tpu.memory_space<any>>
      %c0_i32_132 = arith.constant 0 : i32
      %c0_i32_133 = arith.constant 0 : i32
      %275 = tpu.memref_slice %arg3[%c0_i32_132, %c0_i32_133] : memref<16x32xf32, #tpu.memory_space<vmem>> -> memref<1x32xf32, #tpu.memory_space<vmem>>
      %276 = tpu.memref_slice %arg4[%c0_i32_129] : memref<1x!tpu.dma_semaphore, #tpu.memory_space<semaphore_mem>> -> memref<1x!tpu.dma_semaphore, #tpu.memory_space<semaphore_mem>>
      %277 = tpu.memref_squeeze %276 : memref<1x!tpu.dma_semaphore, #tpu.memory_space<semaphore_mem>> -> memref<!tpu.dma_semaphore, #tpu.memory_space<semaphore_mem>>
      tpu.wait_dma2 semaphore(%277 : memref<!tpu.dma_semaphore, #tpu.memory_space<semaphore_mem>>) src(%274 : memref<1x32xf32, #tpu.memory_space<any>>) dst(%275 : memref<1x32xf32, #tpu.memory_space<vmem>>)
    } else {
    }
    %c7_i32_110 = arith.constant 7 : i32
    %247 = arith.cmpi slt, %c7_i32_110, %225 : i32
    %248 = arith.extui %247 : i1 to i32
    %c0_i32_111 = arith.constant 0 : i32
    %249 = arith.cmpi ne, %248, %c0_i32_111 : i32
    scf.if %249 {
      %c0_i32_129 = arith.constant 0 : i32
      %c0_i32_130 = arith.constant 0 : i32
      %c0_i32_131 = arith.constant 0 : i32
      %274 = tpu.memref_slice %arg2[%c0_i32_130, %c0_i32_131] : memref<128x32xf32, #tpu.memory_space<any>> -> memref<1x32xf32, #tpu.memory_space<any>>
      %c0_i32_132 = arith.constant 0 : i32
      %c0_i32_133 = arith.constant 0 : i32
      %275 = tpu.memref_slice %arg3[%c0_i32_132, %c0_i32_133] : memref<16x32xf32, #tpu.memory_space<vmem>> -> memref<1x32xf32, #tpu.memory_space<vmem>>
      %276 = tpu.memref_slice %arg4[%c0_i32_129] : memref<1x!tpu.dma_semaphore, #tpu.memory_space<semaphore_mem>> -> memref<1x!tpu.dma_semaphore, #tpu.memory_space<semaphore_mem>>
      %277 = tpu.memref_squeeze %276 : memref<1x!tpu.dma_semaphore, #tpu.memory_space<semaphore_mem>> -> memref<!tpu.dma_semaphore, #tpu.memory_space<semaphore_mem>>
      tpu.wait_dma2 semaphore(%277 : memref<!tpu.dma_semaphore, #tpu.memory_space<semaphore_mem>>) src(%274 : memref<1x32xf32, #tpu.memory_space<any>>) dst(%275 : memref<1x32xf32, #tpu.memory_space<vmem>>)
    } else {
    }
    %c8_i32_112 = arith.constant 8 : i32
    %250 = arith.cmpi slt, %c8_i32_112, %225 : i32
    %251 = arith.extui %250 : i1 to i32
    %c0_i32_113 = arith.constant 0 : i32
    %252 = arith.cmpi ne, %251, %c0_i32_113 : i32
    scf.if %252 {
      %c0_i32_129 = arith.constant 0 : i32
      %c0_i32_130 = arith.constant 0 : i32
      %c0_i32_131 = arith.constant 0 : i32
      %274 = tpu.memref_slice %arg2[%c0_i32_130, %c0_i32_131] : memref<128x32xf32, #tpu.memory_space<any>> -> memref<1x32xf32, #tpu.memory_space<any>>
      %c0_i32_132 = arith.constant 0 : i32
      %c0_i32_133 = arith.constant 0 : i32
      %275 = tpu.memref_slice %arg3[%c0_i32_132, %c0_i32_133] : memref<16x32xf32, #tpu.memory_space<vmem>> -> memref<1x32xf32, #tpu.memory_space<vmem>>
      %276 = tpu.memref_slice %arg4[%c0_i32_129] : memref<1x!tpu.dma_semaphore, #tpu.memory_space<semaphore_mem>> -> memref<1x!tpu.dma_semaphore, #tpu.memory_space<semaphore_mem>>
      %277 = tpu.memref_squeeze %276 : memref<1x!tpu.dma_semaphore, #tpu.memory_space<semaphore_mem>> -> memref<!tpu.dma_semaphore, #tpu.memory_space<semaphore_mem>>
      tpu.wait_dma2 semaphore(%277 : memref<!tpu.dma_semaphore, #tpu.memory_space<semaphore_mem>>) src(%274 : memref<1x32xf32, #tpu.memory_space<any>>) dst(%275 : memref<1x32xf32, #tpu.memory_space<vmem>>)
    } else {
    }
    %c9_i32_114 = arith.constant 9 : i32
    %253 = arith.cmpi slt, %c9_i32_114, %225 : i32
    %254 = arith.extui %253 : i1 to i32
    %c0_i32_115 = arith.constant 0 : i32
    %255 = arith.cmpi ne, %254, %c0_i32_115 : i32
    scf.if %255 {
      %c0_i32_129 = arith.constant 0 : i32
      %c0_i32_130 = arith.constant 0 : i32
      %c0_i32_131 = arith.constant 0 : i32
      %274 = tpu.memref_slice %arg2[%c0_i32_130, %c0_i32_131] : memref<128x32xf32, #tpu.memory_space<any>> -> memref<1x32xf32, #tpu.memory_space<any>>
      %c0_i32_132 = arith.constant 0 : i32
      %c0_i32_133 = arith.constant 0 : i32
      %275 = tpu.memref_slice %arg3[%c0_i32_132, %c0_i32_133] : memref<16x32xf32, #tpu.memory_space<vmem>> -> memref<1x32xf32, #tpu.memory_space<vmem>>
      %276 = tpu.memref_slice %arg4[%c0_i32_129] : memref<1x!tpu.dma_semaphore, #tpu.memory_space<semaphore_mem>> -> memref<1x!tpu.dma_semaphore, #tpu.memory_space<semaphore_mem>>
      %277 = tpu.memref_squeeze %276 : memref<1x!tpu.dma_semaphore, #tpu.memory_space<semaphore_mem>> -> memref<!tpu.dma_semaphore, #tpu.memory_space<semaphore_mem>>
      tpu.wait_dma2 semaphore(%277 : memref<!tpu.dma_semaphore, #tpu.memory_space<semaphore_mem>>) src(%274 : memref<1x32xf32, #tpu.memory_space<any>>) dst(%275 : memref<1x32xf32, #tpu.memory_space<vmem>>)
    } else {
    }
    %c10_i32_116 = arith.constant 10 : i32
    %256 = arith.cmpi slt, %c10_i32_116, %225 : i32
    %257 = arith.extui %256 : i1 to i32
    %c0_i32_117 = arith.constant 0 : i32
    %258 = arith.cmpi ne, %257, %c0_i32_117 : i32
    scf.if %258 {
      %c0_i32_129 = arith.constant 0 : i32
      %c0_i32_130 = arith.constant 0 : i32
      %c0_i32_131 = arith.constant 0 : i32
      %274 = tpu.memref_slice %arg2[%c0_i32_130, %c0_i32_131] : memref<128x32xf32, #tpu.memory_space<any>> -> memref<1x32xf32, #tpu.memory_space<any>>
      %c0_i32_132 = arith.constant 0 : i32
      %c0_i32_133 = arith.constant 0 : i32
      %275 = tpu.memref_slice %arg3[%c0_i32_132, %c0_i32_133] : memref<16x32xf32, #tpu.memory_space<vmem>> -> memref<1x32xf32, #tpu.memory_space<vmem>>
      %276 = tpu.memref_slice %arg4[%c0_i32_129] : memref<1x!tpu.dma_semaphore, #tpu.memory_space<semaphore_mem>> -> memref<1x!tpu.dma_semaphore, #tpu.memory_space<semaphore_mem>>
      %277 = tpu.memref_squeeze %276 : memref<1x!tpu.dma_semaphore, #tpu.memory_space<semaphore_mem>> -> memref<!tpu.dma_semaphore, #tpu.memory_space<semaphore_mem>>
      tpu.wait_dma2 semaphore(%277 : memref<!tpu.dma_semaphore, #tpu.memory_space<semaphore_mem>>) src(%274 : memref<1x32xf32, #tpu.memory_space<any>>) dst(%275 : memref<1x32xf32, #tpu.memory_space<vmem>>)
    } else {
    }
    %c11_i32_118 = arith.constant 11 : i32
    %259 = arith.cmpi slt, %c11_i32_118, %225 : i32
    %260 = arith.extui %259 : i1 to i32
    %c0_i32_119 = arith.constant 0 : i32
    %261 = arith.cmpi ne, %260, %c0_i32_119 : i32
    scf.if %261 {
      %c0_i32_129 = arith.constant 0 : i32
      %c0_i32_130 = arith.constant 0 : i32
      %c0_i32_131 = arith.constant 0 : i32
      %274 = tpu.memref_slice %arg2[%c0_i32_130, %c0_i32_131] : memref<128x32xf32, #tpu.memory_space<any>> -> memref<1x32xf32, #tpu.memory_space<any>>
      %c0_i32_132 = arith.constant 0 : i32
      %c0_i32_133 = arith.constant 0 : i32
      %275 = tpu.memref_slice %arg3[%c0_i32_132, %c0_i32_133] : memref<16x32xf32, #tpu.memory_space<vmem>> -> memref<1x32xf32, #tpu.memory_space<vmem>>
      %276 = tpu.memref_slice %arg4[%c0_i32_129] : memref<1x!tpu.dma_semaphore, #tpu.memory_space<semaphore_mem>> -> memref<1x!tpu.dma_semaphore, #tpu.memory_space<semaphore_mem>>
      %277 = tpu.memref_squeeze %276 : memref<1x!tpu.dma_semaphore, #tpu.memory_space<semaphore_mem>> -> memref<!tpu.dma_semaphore, #tpu.memory_space<semaphore_mem>>
      tpu.wait_dma2 semaphore(%277 : memref<!tpu.dma_semaphore, #tpu.memory_space<semaphore_mem>>) src(%274 : memref<1x32xf32, #tpu.memory_space<any>>) dst(%275 : memref<1x32xf32, #tpu.memory_space<vmem>>)
    } else {
    }
    %c12_i32_120 = arith.constant 12 : i32
    %262 = arith.cmpi slt, %c12_i32_120, %225 : i32
    %263 = arith.extui %262 : i1 to i32
    %c0_i32_121 = arith.constant 0 : i32
    %264 = arith.cmpi ne, %263, %c0_i32_121 : i32
    scf.if %264 {
      %c0_i32_129 = arith.constant 0 : i32
      %c0_i32_130 = arith.constant 0 : i32
      %c0_i32_131 = arith.constant 0 : i32
      %274 = tpu.memref_slice %arg2[%c0_i32_130, %c0_i32_131] : memref<128x32xf32, #tpu.memory_space<any>> -> memref<1x32xf32, #tpu.memory_space<any>>
      %c0_i32_132 = arith.constant 0 : i32
      %c0_i32_133 = arith.constant 0 : i32
      %275 = tpu.memref_slice %arg3[%c0_i32_132, %c0_i32_133] : memref<16x32xf32, #tpu.memory_space<vmem>> -> memref<1x32xf32, #tpu.memory_space<vmem>>
      %276 = tpu.memref_slice %arg4[%c0_i32_129] : memref<1x!tpu.dma_semaphore, #tpu.memory_space<semaphore_mem>> -> memref<1x!tpu.dma_semaphore, #tpu.memory_space<semaphore_mem>>
      %277 = tpu.memref_squeeze %276 : memref<1x!tpu.dma_semaphore, #tpu.memory_space<semaphore_mem>> -> memref<!tpu.dma_semaphore, #tpu.memory_space<semaphore_mem>>
      tpu.wait_dma2 semaphore(%277 : memref<!tpu.dma_semaphore, #tpu.memory_space<semaphore_mem>>) src(%274 : memref<1x32xf32, #tpu.memory_space<any>>) dst(%275 : memref<1x32xf32, #tpu.memory_space<vmem>>)
    } else {
    }
    %c13_i32_122 = arith.constant 13 : i32
    %265 = arith.cmpi slt, %c13_i32_122, %225 : i32
    %266 = arith.extui %265 : i1 to i32
    %c0_i32_123 = arith.constant 0 : i32
    %267 = arith.cmpi ne, %266, %c0_i32_123 : i32
    scf.if %267 {
      %c0_i32_129 = arith.constant 0 : i32
      %c0_i32_130 = arith.constant 0 : i32
      %c0_i32_131 = arith.constant 0 : i32
      %274 = tpu.memref_slice %arg2[%c0_i32_130, %c0_i32_131] : memref<128x32xf32, #tpu.memory_space<any>> -> memref<1x32xf32, #tpu.memory_space<any>>
      %c0_i32_132 = arith.constant 0 : i32
      %c0_i32_133 = arith.constant 0 : i32
      %275 = tpu.memref_slice %arg3[%c0_i32_132, %c0_i32_133] : memref<16x32xf32, #tpu.memory_space<vmem>> -> memref<1x32xf32, #tpu.memory_space<vmem>>
      %276 = tpu.memref_slice %arg4[%c0_i32_129] : memref<1x!tpu.dma_semaphore, #tpu.memory_space<semaphore_mem>> -> memref<1x!tpu.dma_semaphore, #tpu.memory_space<semaphore_mem>>
      %277 = tpu.memref_squeeze %276 : memref<1x!tpu.dma_semaphore, #tpu.memory_space<semaphore_mem>> -> memref<!tpu.dma_semaphore, #tpu.memory_space<semaphore_mem>>
      tpu.wait_dma2 semaphore(%277 : memref<!tpu.dma_semaphore, #tpu.memory_space<semaphore_mem>>) src(%274 : memref<1x32xf32, #tpu.memory_space<any>>) dst(%275 : memref<1x32xf32, #tpu.memory_space<vmem>>)
    } else {
    }
    %c14_i32_124 = arith.constant 14 : i32
    %268 = arith.cmpi slt, %c14_i32_124, %225 : i32
    %269 = arith.extui %268 : i1 to i32
    %c0_i32_125 = arith.constant 0 : i32
    %270 = arith.cmpi ne, %269, %c0_i32_125 : i32
    scf.if %270 {
      %c0_i32_129 = arith.constant 0 : i32
      %c0_i32_130 = arith.constant 0 : i32
      %c0_i32_131 = arith.constant 0 : i32
      %274 = tpu.memref_slice %arg2[%c0_i32_130, %c0_i32_131] : memref<128x32xf32, #tpu.memory_space<any>> -> memref<1x32xf32, #tpu.memory_space<any>>
      %c0_i32_132 = arith.constant 0 : i32
      %c0_i32_133 = arith.constant 0 : i32
      %275 = tpu.memref_slice %arg3[%c0_i32_132, %c0_i32_133] : memref<16x32xf32, #tpu.memory_space<vmem>> -> memref<1x32xf32, #tpu.memory_space<vmem>>
      %276 = tpu.memref_slice %arg4[%c0_i32_129] : memref<1x!tpu.dma_semaphore, #tpu.memory_space<semaphore_mem>> -> memref<1x!tpu.dma_semaphore, #tpu.memory_space<semaphore_mem>>
      %277 = tpu.memref_squeeze %276 : memref<1x!tpu.dma_semaphore, #tpu.memory_space<semaphore_mem>> -> memref<!tpu.dma_semaphore, #tpu.memory_space<semaphore_mem>>
      tpu.wait_dma2 semaphore(%277 : memref<!tpu.dma_semaphore, #tpu.memory_space<semaphore_mem>>) src(%274 : memref<1x32xf32, #tpu.memory_space<any>>) dst(%275 : memref<1x32xf32, #tpu.memory_space<vmem>>)
    } else {
    }
    %c15_i32_126 = arith.constant 15 : i32
    %271 = arith.cmpi slt, %c15_i32_126, %225 : i32
    %272 = arith.extui %271 : i1 to i32
    %c0_i32_127 = arith.constant 0 : i32
    %273 = arith.cmpi ne, %272, %c0_i32_127 : i32
    scf.if %273 {
      %c0_i32_129 = arith.constant 0 : i32
      %c0_i32_130 = arith.constant 0 : i32
      %c0_i32_131 = arith.constant 0 : i32
      %274 = tpu.memref_slice %arg2[%c0_i32_130, %c0_i32_131] : memref<128x32xf32, #tpu.memory_space<any>> -> memref<1x32xf32, #tpu.memory_space<any>>
      %c0_i32_132 = arith.constant 0 : i32
      %c0_i32_133 = arith.constant 0 : i32
      %275 = tpu.memref_slice %arg3[%c0_i32_132, %c0_i32_133] : memref<16x32xf32, #tpu.memory_space<vmem>> -> memref<1x32xf32, #tpu.memory_space<vmem>>
      %276 = tpu.memref_slice %arg4[%c0_i32_129] : memref<1x!tpu.dma_semaphore, #tpu.memory_space<semaphore_mem>> -> memref<1x!tpu.dma_semaphore, #tpu.memory_space<semaphore_mem>>
      %277 = tpu.memref_squeeze %276 : memref<1x!tpu.dma_semaphore, #tpu.memory_space<semaphore_mem>> -> memref<!tpu.dma_semaphore, #tpu.memory_space<semaphore_mem>>
      tpu.wait_dma2 semaphore(%277 : memref<!tpu.dma_semaphore, #tpu.memory_space<semaphore_mem>>) src(%274 : memref<1x32xf32, #tpu.memory_space<any>>) dst(%275 : memref<1x32xf32, #tpu.memory_space<vmem>>)
    } else {
    }
    %c16_i32_128 = arith.constant 16 : i32
    return
  }
  func.func @transform_1(%arg0: i32, %arg1: memref<16xi32, #tpu.memory_space<smem>>) -> (i32, i32) {
    %c0_i32 = arith.constant 0 : i32
    %c0_i32_0 = arith.constant 0 : i32
    return %arg0, %c0_i32 : i32, i32
  }
}

</mosaic_0001>

<llo_original>
// kernel: tpu_custom_call.1
$region0: #{tpu_custom_call.1}
  #allocation0 [shape = 'u32[]', space=smem, size = 0x4, offset = 0x4, fixed_abs, tag = 'smem constant byte address 0x4 - core index']
  #allocation1 [shape = 'u32[144,128]{1,0:T(1,128)}', space=vmem, size = 0x12000, scoped, tag = 'internal scratch']
  #allocation2 [shape = 's32[1]{0}', space=sflag, size = 0x4, scoped, tag = 'scratch operand']
  #allocation3 [shape = 's32[1]{0}', space=sflag, size = 0x4, scoped, tag = 'scoped memory for tpu_custom_call.1']
  #allocation4 [shape = 'u8[512]{0}', space=smem, size = 0x200, scoped, tag = 'prefetched SMEM operand 0']
  #allocation7 [shape = 's32[]', space=sflag, size = 0x4, offset = 0, fixed_abs, tag = 'sflag constant byte address 0x0 - dummy sync flag']
  #allocation8 [shape = 's32[]', space=sflag, size = 0x4, offset = 0, fixed_abs, tag = 'sflag constant byte address 0x0 - dummy sync flag']
  #allocation9 [shape = 's32[]', space=sflag, size = 0x4, offset = 0, fixed_abs, tag = 'sflag constant byte address 0x0 - dummy sync flag']
  #allocation10 [shape = 's32[]', space=sflag, size = 0x4, offset = 0, fixed_abs, tag = 'sflag constant byte address 0x0 - dummy sync flag']
  #allocation11 [shape = 's32[]', space=sflag, size = 0x4, offset = 0, fixed_abs, tag = 'sflag constant byte address 0x0 - dummy sync flag']
  #allocation12 [shape = 's32[]', space=sflag, size = 0x4, offset = 0, fixed_abs, tag = 'sflag constant byte address 0x0 - dummy sync flag']
  #allocation13 [shape = 's32[]', space=sflag, size = 0x4, offset = 0, fixed_abs, tag = 'sflag constant byte address 0x0 - dummy sync flag']
  #allocation14 [shape = 's32[]', space=sflag, size = 0x4, offset = 0, fixed_abs, tag = 'sflag constant byte address 0x0 - dummy sync flag']
  #allocation15 [shape = 's32[]', space=sflag, size = 0x4, offset = 0, fixed_abs, tag = 'sflag constant byte address 0x0 - dummy sync flag']
  #allocation16 [shape = 's32[]', space=sflag, size = 0x4, offset = 0, fixed_abs, tag = 'sflag constant byte address 0x0 - dummy sync flag']
  #allocation17 [shape = 's32[]', space=sflag, size = 0x4, offset = 0, fixed_abs, tag = 'sflag constant byte address 0x0 - dummy sync flag']
  #allocation18 [shape = 's32[]', space=sflag, size = 0x4, offset = 0, fixed_abs, tag = 'sflag constant byte address 0x0 - dummy sync flag']
  #allocation19 [shape = 's32[]', space=sflag, size = 0x4, offset = 0, fixed_abs, tag = 'sflag constant byte address 0x0 - dummy sync flag']
  #allocation20 [shape = 's32[]', space=sflag, size = 0x4, offset = 0, fixed_abs, tag = 'sflag constant byte address 0x0 - dummy sync flag']
  #allocation21 [shape = 's32[]', space=sflag, size = 0x4, offset = 0, fixed_abs, tag = 'sflag constant byte address 0x0 - dummy sync flag']
  #allocation22 [shape = 's32[]', space=sflag, size = 0x4, offset = 0, fixed_abs, tag = 'sflag constant byte address 0x0 - dummy sync flag']
  %s0 = inlined_call_operand.vmem [shape: s32[16], index: 0, kind: input, shape index: {}]
  %s1 = inlined_call_operand.vmem [shape: f32[128,32], index: 1, kind: input, shape index: {}]
  %s2 = inlined_call_operand.hbm [shape: f32[16,32], index: 2, kind: output, shape index: {}]
  %s3 = sld [smem:[#allocation0]]
  $region682: #{tpu_custom_call.1} parent=0
    _
  %s5 = ssub.s32 1, %s3
  %s6 = scalar_select 0, %s5, %s3
  %s7 = sshll.u32 %s0, 4
  %s8 = int_to_ptr.vmem [resolvable:$true] %s7
  %10 = dma.vmem_to_smem %s8, 16, [#allocation4], [#allocation3]
  %11 = dma.done [#allocation3], 16
  %12 = sfence
  $region1: #{tpu_custom_call.1} parent=0
    #allocation5 [shape = 'u8[8192]{0}', space=vmem, size = 0x2000, scoped, tag = 'output window, operand 0, single buffered']
    #allocation6 [shape = 's32[1]{0}', space=sflag, size = 0x4, scoped, tag = 'scoped memory for tpu_custom_call.1']
    %13 = vsyncpa [#allocation6], 0
    %s14 = smul.u32 0, 16
    %s15 = sld [smem:[#allocation4 + %s14]]
    %p16 = scmp.ge.s32.totalorder %s15, 0
    %p17 = scmp.lt.s32.totalorder %s15, 128
    %p18 = pnand %p16, %p17
    %p19 = pneg %p18
    %s20 = scalar_select %p19, %s15, 0
    // Predicated region
    $region2: #{tpu_custom_call.1} parent=1 // pred_check
      _
    $region3: #{tpu_custom_call.1} parent=1 // pred_check_branch
      %22 = sbr.rel (%p18) target = $region5
    $region4: #{tpu_custom_call.1} parent=1 // pred_region
      %s23 = scalar_lea.vmem %s1, %s20
      %p25 = scmp.lt.u32.totalorder 1, 8
      %p26 = pneg %p25
      // Predicated region
      $region6: #{tpu_custom_call.1} parent=4 // pred_check
        _
      $region7: #{tpu_custom_call.1} parent=4 // pred_check_branch
        %28 = sbr.rel (%p25) target = $region9
      $region8: #{tpu_custom_call.1} parent=4 // pred_region
        %s43 = sand.u32 1, 7
        %p44 = scmp.eq.s32.totalorder %s43, 0
        %p45 = pneg %p44
        // Predicated region
        $region21: #{tpu_custom_call.1} parent=8 // pred_check
          _
        $region22: #{tpu_custom_call.1} parent=8 // pred_check_branch
          %47 = sbr.rel (%p44) target = $region24
        $region23: #{tpu_custom_call.1} parent=8 // pred_region
          %s48 = sand.u32 1, 7
          %s49 = ssub.s32 1, %s48
          %s50 = scalar_lea.vmem %s23, %s49
          %s51 = ssub.s32 1, %s48
          %s52 = scalar_lea.vmem [#allocation5], %s51
          %s53 = sshllo.u32 0, %s48
          loop: start=0, step=1, limit=1
          $region25: #{tpu_custom_call.1} parent=23 // loop_pre_header
            _
          $region26: #{tpu_custom_call.1} parent=23 // loop_header
            %s55 = sphi 0, %s59
            %p56 = scmp.ge.s32.totalorder %s55, 1
            %s60 = sphi %s50, %s50
            %s61 = sphi %s52, %s52
          $region27: #{tpu_custom_call.1} parent=23 // loop_header_branch
            %58 = sbr.rel (%p56) target = $region31
          $region28: #{tpu_custom_call.1} parent=23 // loop_body
            %v62 = vld [vmem:[%s60] sm:%s53]
            %63 = vst [vmem:[%s61] sm:%s53] %v62
          $region29: #{tpu_custom_call.1} parent=23 // loop_footer
            %s59 = sadd.s32 1, %s55
          $region30: #{tpu_custom_call.1} parent=23 // loop_footer_branch
            %54 = sbr.rel target = $region26
          $region31: #{tpu_custom_call.1} parent=23 // loop_exit
            _
        $region24: #{tpu_custom_call.1} parent=8 // pred_fallthru
          _
      $region9: #{tpu_custom_call.1} parent=4 // pred_fallthru
        _
      // Predicated region
      $region10: #{tpu_custom_call.1} parent=4 // pred_check
        %p29 = pneg %p25
      $region11: #{tpu_custom_call.1} parent=4 // pred_check_branch
        %31 = sbr.rel (%p29) target = $region13
      $region12: #{tpu_custom_call.1} parent=4 // pred_region
        %s32 = sshllo.u32 0, 1
        loop: start=0, step=1, limit=1
        $region14: #{tpu_custom_call.1} parent=12 // loop_pre_header
          _
        $region15: #{tpu_custom_call.1} parent=12 // loop_header
          %s34 = sphi 0, %s38
          %p35 = scmp.ge.s32.totalorder %s34, 1
          %s39 = sphi %s23, %s23
          %s40 = sphi [#allocation5], [#allocation5]
        $region16: #{tpu_custom_call.1} parent=12 // loop_header_branch
          %37 = sbr.rel (%p35) target = $region20
        $region17: #{tpu_custom_call.1} parent=12 // loop_body
          %v41 = vld [vmem:[%s39] sm:%s32]
          %42 = vst [vmem:[%s40] sm:%s32] %v41
        $region18: #{tpu_custom_call.1} parent=12 // loop_footer
          %s38 = sadd.s32 1, %s34
        $region19: #{tpu_custom_call.1} parent=12 // loop_footer_branch
          %33 = sbr.rel target = $region15
        $region20: #{tpu_custom_call.1} parent=12 // loop_exit
          _
      $region13: #{tpu_custom_call.1} parent=4 // pred_fallthru
        _
      // Predicated region
      $region32: #{tpu_custom_call.1} parent=4 // pred_check
        _
      $region33: #{tpu_custom_call.1} parent=4 // pred_check_branch
        %66 = sbr.rel (0) target = $region35
      $region34: #{tpu_custom_call.1} parent=4 // pred_region
        %67 = vsyncadd [#allocation2], 16
      $region35: #{tpu_custom_call.1} parent=4 // pred_fallthru
        _
    $region5: #{tpu_custom_call.1} parent=1 // pred_fallthru
      _
    // Predicated region
    $region36: #{tpu_custom_call.1} parent=1 // pred_check
      %p68 = pneg %p18
    $region37: #{tpu_custom_call.1} parent=1 // pred_check_branch
      %70 = sbr.rel (%p68) target = $region39
    $region38: #{tpu_custom_call.1} parent=1 // pred_region
      %vm71 = vcmask 253952
      %72 = vst.msk [vmem:[#allocation5] sm:$0x1] %vm71, 0.0
    $region39: #{tpu_custom_call.1} parent=1 // pred_fallthru
      _
    %s73 = scalar_select %p19, 1, 0
    %s74 = sadd.s32 %s14, 1
    %s75 = sld [smem:[#allocation4 + %s74]]
    %p76 = scmp.ge.s32.totalorder %s75, 0
    %p77 = scmp.lt.s32.totalorder %s75, 128
    %p78 = pnand %p76, %p77
    %p79 = pneg %p78
    %s80 = scalar_select %p79, %s75, 0
    // Predicated region
    $region40: #{tpu_custom_call.1} parent=1 // pred_check
      _
    $region41: #{tpu_custom_call.1} parent=1 // pred_check_branch
      %82 = sbr.rel (%p78) target = $region43
    $region42: #{tpu_custom_call.1} parent=1 // pred_region
      %s83 = scalar_lea.vmem %s1, %s80
      %s84 = scalar_lea.vmem [#allocation5], 1
      %p86 = scmp.lt.u32.totalorder 1, 8
      %p87 = pneg %p86
      // Predicated region
      $region44: #{tpu_custom_call.1} parent=42 // pred_check
        _
      $region45: #{tpu_custom_call.1} parent=42 // pred_check_branch
        %89 = sbr.rel (%p86) target = $region47
      $region46: #{tpu_custom_call.1} parent=42 // pred_region
        %s104 = sand.u32 1, 7
        %p105 = scmp.eq.s32.totalorder %s104, 0
        %p106 = pneg %p105
        // Predicated region
        $region59: #{tpu_custom_call.1} parent=46 // pred_check
          _
        $region60: #{tpu_custom_call.1} parent=46 // pred_check_branch
          %108 = sbr.rel (%p105) target = $region62
        $region61: #{tpu_custom_call.1} parent=46 // pred_region
          %s109 = sand.u32 1, 7
          %s110 = ssub.s32 1, %s109
          %s111 = scalar_lea.vmem %s83, %s110
          %s112 = ssub.s32 1, %s109
          %s113 = scalar_lea.vmem %s84, %s112 [#allocation5]
          %s114 = sshllo.u32 0, %s109
          loop: start=0, step=1, limit=1
          $region63: #{tpu_custom_call.1} parent=61 // loop_pre_header
            _
          $region64: #{tpu_custom_call.1} parent=61 // loop_header
            %s116 = sphi 0, %s120
            %p117 = scmp.ge.s32.totalorder %s116, 1
            %s121 = sphi %s111, %s111
            %s122 = sphi %s113, %s113
          $region65: #{tpu_custom_call.1} parent=61 // loop_header_branch
            %119 = sbr.rel (%p117) target = $region69
          $region66: #{tpu_custom_call.1} parent=61 // loop_body
            %v123 = vld [vmem:[%s121] sm:%s114]
            %124 = vst [vmem:[%s122] sm:%s114] %v123
          $region67: #{tpu_custom_call.1} parent=61 // loop_footer
            %s120 = sadd.s32 1, %s116
          $region68: #{tpu_custom_call.1} parent=61 // loop_footer_branch
            %115 = sbr.rel target = $region64
          $region69: #{tpu_custom_call.1} parent=61 // loop_exit
            _
        $region62: #{tpu_custom_call.1} parent=46 // pred_fallthru
          _
      $region47: #{tpu_custom_call.1} parent=42 // pred_fallthru
        _
      // Predicated region
      $region48: #{tpu_custom_call.1} parent=42 // pred_check
        %p90 = pneg %p86
      $region49: #{tpu_custom_call.1} parent=42 // pred_check_branch
        %92 = sbr.rel (%p90) target = $region51
      $region50: #{tpu_custom_call.1} parent=42 // pred_region
        %s93 = sshllo.u32 0, 1
        loop: start=0, step=1, limit=1
        $region52: #{tpu_custom_call.1} parent=50 // loop_pre_header
          _
        $region53: #{tpu_custom_call.1} parent=50 // loop_header
          %s95 = sphi 0, %s99
          %p96 = scmp.ge.s32.totalorder %s95, 1
          %s100 = sphi %s83, %s83
          %s101 = sphi %s84, %s84
        $region54: #{tpu_custom_call.1} parent=50 // loop_header_branch
          %98 = sbr.rel (%p96) target = $region58
        $region55: #{tpu_custom_call.1} parent=50 // loop_body
          %v102 = vld [vmem:[%s100] sm:%s93]
          %103 = vst [vmem:[%s101] sm:%s93] %v102
        $region56: #{tpu_custom_call.1} parent=50 // loop_footer
          %s99 = sadd.s32 1, %s95
        $region57: #{tpu_custom_call.1} parent=50 // loop_footer_branch
          %94 = sbr.rel target = $region53
        $region58: #{tpu_custom_call.1} parent=50 // loop_exit
          _
      $region51: #{tpu_custom_call.1} parent=42 // pred_fallthru
        _
      // Predicated region
      $region70: #{tpu_custom_call.1} parent=42 // pred_check
        _
      $region71: #{tpu_custom_call.1} parent=42 // pred_check_branch
        %127 = sbr.rel (0) target = $region73
      $region72: #{tpu_custom_call.1} parent=42 // pred_region
        %128 = vsyncadd [#allocation2], 16
      $region73: #{tpu_custom_call.1} parent=42 // pred_fallthru
        _
    $region43: #{tpu_custom_call.1} parent=1 // pred_fallthru
      _
    %p129 = pneg %p79
    // Predicated region
    $region74: #{tpu_custom_call.1} parent=1 // pred_check
      _
    $region75: #{tpu_custom_call.1} parent=1 // pred_check_branch
      %131 = sbr.rel (%p79) target = $region77
    $region76: #{tpu_custom_call.1} parent=1 // pred_region
      %vm132 = vcmask 253952
      %133 = vst.msk [vmem:[#allocation5 + $0x1] sm:$0x1] %vm132, 0.0
    $region77: #{tpu_custom_call.1} parent=1 // pred_fallthru
      _
    %s134 = scalar_select %p79, 1, 0
    %s135 = sadd.s32 %s73, %s134
    %s136 = sadd.s32 %s14, 2
    %s137 = sld [smem:[#allocation4 + %s136]]
    %p138 = scmp.ge.s32.totalorder %s137, 0
    %p139 = scmp.lt.s32.totalorder %s137, 128
    %p140 = pnand %p138, %p139
    %p141 = pneg %p140
    %s142 = scalar_select %p141, %s137, 0
    // Predicated region
    $region78: #{tpu_custom_call.1} parent=1 // pred_check
      _
    $region79: #{tpu_custom_call.1} parent=1 // pred_check_branch
      %144 = sbr.rel (%p140) target = $region81
    $region80: #{tpu_custom_call.1} parent=1 // pred_region
      %s145 = scalar_lea.vmem %s1, %s142
      %s146 = scalar_lea.vmem [#allocation5], 2
      %p148 = scmp.lt.u32.totalorder 1, 8
      %p149 = pneg %p148
      // Predicated region
      $region82: #{tpu_custom_call.1} parent=80 // pred_check
        _
      $region83: #{tpu_custom_call.1} parent=80 // pred_check_branch
        %151 = sbr.rel (%p148) target = $region85
      $region84: #{tpu_custom_call.1} parent=80 // pred_region
        %s166 = sand.u32 1, 7
        %p167 = scmp.eq.s32.totalorder %s166, 0
        %p168 = pneg %p167
        // Predicated region
        $region97: #{tpu_custom_call.1} parent=84 // pred_check
          _
        $region98: #{tpu_custom_call.1} parent=84 // pred_check_branch
          %170 = sbr.rel (%p167) target = $region100
        $region99: #{tpu_custom_call.1} parent=84 // pred_region
          %s171 = sand.u32 1, 7
          %s172 = ssub.s32 1, %s171
          %s173 = scalar_lea.vmem %s145, %s172
          %s174 = ssub.s32 1, %s171
          %s175 = scalar_lea.vmem %s146, %s174 [#allocation5]
          %s176 = sshllo.u32 0, %s171
          loop: start=0, step=1, limit=1
          $region101: #{tpu_custom_call.1} parent=99 // loop_pre_header
            _
          $region102: #{tpu_custom_call.1} parent=99 // loop_header
            %s178 = sphi 0, %s182
            %p179 = scmp.ge.s32.totalorder %s178, 1
            %s183 = sphi %s173, %s173
            %s184 = sphi %s175, %s175
          $region103: #{tpu_custom_call.1} parent=99 // loop_header_branch
            %181 = sbr.rel (%p179) target = $region107
          $region104: #{tpu_custom_call.1} parent=99 // loop_body
            %v185 = vld [vmem:[%s183] sm:%s176]
            %186 = vst [vmem:[%s184] sm:%s176] %v185
          $region105: #{tpu_custom_call.1} parent=99 // loop_footer
            %s182 = sadd.s32 1, %s178
          $region106: #{tpu_custom_call.1} parent=99 // loop_footer_branch
            %177 = sbr.rel target = $region102
          $region107: #{tpu_custom_call.1} parent=99 // loop_exit
            _
        $region100: #{tpu_custom_call.1} parent=84 // pred_fallthru
          _
      $region85: #{tpu_custom_call.1} parent=80 // pred_fallthru
        _
      // Predicated region
      $region86: #{tpu_custom_call.1} parent=80 // pred_check
        %p152 = pneg %p148
      $region87: #{tpu_custom_call.1} parent=80 // pred_check_branch
        %154 = sbr.rel (%p152) target = $region89
      $region88: #{tpu_custom_call.1} parent=80 // pred_region
        %s155 = sshllo.u32 0, 1
        loop: start=0, step=1, limit=1
        $region90: #{tpu_custom_call.1} parent=88 // loop_pre_header
          _
        $region91: #{tpu_custom_call.1} parent=88 // loop_header
          %s157 = sphi 0, %s161
          %p158 = scmp.ge.s32.totalorder %s157, 1
          %s162 = sphi %s145, %s145
          %s163 = sphi %s146, %s146
        $region92: #{tpu_custom_call.1} parent=88 // loop_header_branch
          %160 = sbr.rel (%p158) target = $region96
        $region93: #{tpu_custom_call.1} parent=88 // loop_body
          %v164 = vld [vmem:[%s162] sm:%s155]
          %165 = vst [vmem:[%s163] sm:%s155] %v164
        $region94: #{tpu_custom_call.1} parent=88 // loop_footer
          %s161 = sadd.s32 1, %s157
        $region95: #{tpu_custom_call.1} parent=88 // loop_footer_branch
          %156 = sbr.rel target = $region91
        $region96: #{tpu_custom_call.1} parent=88 // loop_exit
          _
      $region89: #{tpu_custom_call.1} parent=80 // pred_fallthru
        _
      // Predicated region
      $region108: #{tpu_custom_call.1} parent=80 // pred_check
        _
      $region109: #{tpu_custom_call.1} parent=80 // pred_check_branch
        %189 = sbr.rel (0) target = $region111
      $region110: #{tpu_custom_call.1} parent=80 // pred_region
        %190 = vsyncadd [#allocation2], 16
      $region111: #{tpu_custom_call.1} parent=80 // pred_fallthru
        _
    $region81: #{tpu_custom_call.1} parent=1 // pred_fallthru
      _
    %p191 = pneg %p141
    // Predicated region
    $region112: #{tpu_custom_call.1} parent=1 // pred_check
      _
    $region113: #{tpu_custom_call.1} parent=1 // pred_check_branch
      %193 = sbr.rel (%p141) target = $region115
    $region114: #{tpu_custom_call.1} parent=1 // pred_region
      %vm194 = vcmask 253952
      %195 = vst.msk [vmem:[#allocation5 + $0x2] sm:$0x1] %vm194, 0.0
    $region115: #{tpu_custom_call.1} parent=1 // pred_fallthru
      _
    %s196 = scalar_select %p141, 1, 0
    %s197 = sadd.s32 %s135, %s196
    %s198 = sadd.s32 %s14, 3
    %s199 = sld [smem:[#allocation4 + %s198]]
    %p200 = scmp.ge.s32.totalorder %s199, 0
    %p201 = scmp.lt.s32.totalorder %s199, 128
    %p202 = pnand %p200, %p201
    %p203 = pneg %p202
    %s204 = scalar_select %p203, %s199, 0
    // Predicated region
    $region116: #{tpu_custom_call.1} parent=1 // pred_check
      _
    $region117: #{tpu_custom_call.1} parent=1 // pred_check_branch
      %206 = sbr.rel (%p202) target = $region119
    $region118: #{tpu_custom_call.1} parent=1 // pred_region
      %s207 = scalar_lea.vmem %s1, %s204
      %s208 = scalar_lea.vmem [#allocation5], 3
      %p210 = scmp.lt.u32.totalorder 1, 8
      %p211 = pneg %p210
      // Predicated region
      $region120: #{tpu_custom_call.1} parent=118 // pred_check
        _
      $region121: #{tpu_custom_call.1} parent=118 // pred_check_branch
        %213 = sbr.rel (%p210) target = $region123
      $region122: #{tpu_custom_call.1} parent=118 // pred_region
        %s228 = sand.u32 1, 7
        %p229 = scmp.eq.s32.totalorder %s228, 0
        %p230 = pneg %p229
        // Predicated region
        $region135: #{tpu_custom_call.1} parent=122 // pred_check
          _
        $region136: #{tpu_custom_call.1} parent=122 // pred_check_branch
          %232 = sbr.rel (%p229) target = $region138
        $region137: #{tpu_custom_call.1} parent=122 // pred_region
          %s233 = sand.u32 1, 7
          %s234 = ssub.s32 1, %s233
          %s235 = scalar_lea.vmem %s207, %s234
          %s236 = ssub.s32 1, %s233
          %s237 = scalar_lea.vmem %s208, %s236 [#allocation5]
          %s238 = sshllo.u32 0, %s233
          loop: start=0, step=1, limit=1
          $region139: #{tpu_custom_call.1} parent=137 // loop_pre_header
            _
          $region140: #{tpu_custom_call.1} parent=137 // loop_header
            %s240 = sphi 0, %s244
            %p241 = scmp.ge.s32.totalorder %s240, 1
            %s245 = sphi %s235, %s235
            %s246 = sphi %s237, %s237
          $region141: #{tpu_custom_call.1} parent=137 // loop_header_branch
            %243 = sbr.rel (%p241) target = $region145
          $region142: #{tpu_custom_call.1} parent=137 // loop_body
            %v247 = vld [vmem:[%s245] sm:%s238]
            %248 = vst [vmem:[%s246] sm:%s238] %v247
          $region143: #{tpu_custom_call.1} parent=137 // loop_footer
            %s244 = sadd.s32 1, %s240
          $region144: #{tpu_custom_call.1} parent=137 // loop_footer_branch
            %239 = sbr.rel target = $region140
          $region145: #{tpu_custom_call.1} parent=137 // loop_exit
            _
        $region138: #{tpu_custom_call.1} parent=122 // pred_fallthru
          _
      $region123: #{tpu_custom_call.1} parent=118 // pred_fallthru
        _
      // Predicated region
      $region124: #{tpu_custom_call.1} parent=118 // pred_check
        %p214 = pneg %p210
      $region125: #{tpu_custom_call.1} parent=118 // pred_check_branch
        %216 = sbr.rel (%p214) target = $region127
      $region126: #{tpu_custom_call.1} parent=118 // pred_region
        %s217 = sshllo.u32 0, 1
        loop: start=0, step=1, limit=1
        $region128: #{tpu_custom_call.1} parent=126 // loop_pre_header
          _
        $region129: #{tpu_custom_call.1} parent=126 // loop_header
          %s219 = sphi 0, %s223
          %p220 = scmp.ge.s32.totalorder %s219, 1
          %s224 = sphi %s207, %s207
          %s225 = sphi %s208, %s208
        $region130: #{tpu_custom_call.1} parent=126 // loop_header_branch
          %222 = sbr.rel (%p220) target = $region134
        $region131: #{tpu_custom_call.1} parent=126 // loop_body
          %v226 = vld [vmem:[%s224] sm:%s217]
          %227 = vst [vmem:[%s225] sm:%s217] %v226
        $region132: #{tpu_custom_call.1} parent=126 // loop_footer
          %s223 = sadd.s32 1, %s219
        $region133: #{tpu_custom_call.1} parent=126 // loop_footer_branch
          %218 = sbr.rel target = $region129
        $region134: #{tpu_custom_call.1} parent=126 // loop_exit
          _
      $region127: #{tpu_custom_call.1} parent=118 // pred_fallthru
        _
      // Predicated region
      $region146: #{tpu_custom_call.1} parent=118 // pred_check
        _
      $region147: #{tpu_custom_call.1} parent=118 // pred_check_branch
        %251 = sbr.rel (0) target = $region149
      $region148: #{tpu_custom_call.1} parent=118 // pred_region
        %252 = vsyncadd [#allocation2], 16
      $region149: #{tpu_custom_call.1} parent=118 // pred_fallthru
        _
    $region119: #{tpu_custom_call.1} parent=1 // pred_fallthru
      _
    %p253 = pneg %p203
    // Predicated region
    $region150: #{tpu_custom_call.1} parent=1 // pred_check
      _
    $region151: #{tpu_custom_call.1} parent=1 // pred_check_branch
      %255 = sbr.rel (%p203) target = $region153
    $region152: #{tpu_custom_call.1} parent=1 // pred_region
      %vm256 = vcmask 253952
      %257 = vst.msk [vmem:[#allocation5 + $0x3] sm:$0x1] %vm256, 0.0
    $region153: #{tpu_custom_call.1} parent=1 // pred_fallthru
      _
    %s258 = scalar_select %p203, 1, 0
    %s259 = sadd.s32 %s197, %s258
    %s260 = sadd.s32 %s14, 4
    %s261 = sld [smem:[#allocation4 + %s260]]
    %p262 = scmp.ge.s32.totalorder %s261, 0
    %p263 = scmp.lt.s32.totalorder %s261, 128
    %p264 = pnand %p262, %p263
    %p265 = pneg %p264
    %s266 = scalar_select %p265, %s261, 0
    // Predicated region
    $region154: #{tpu_custom_call.1} parent=1 // pred_check
      _
    $region155: #{tpu_custom_call.1} parent=1 // pred_check_branch
      %268 = sbr.rel (%p264) target = $region157
    $region156: #{tpu_custom_call.1} parent=1 // pred_region
      %s269 = scalar_lea.vmem %s1, %s266
      %s270 = scalar_lea.vmem [#allocation5], 4
      %p272 = scmp.lt.u32.totalorder 1, 8
      %p273 = pneg %p272
      // Predicated region
      $region158: #{tpu_custom_call.1} parent=156 // pred_check
        _
      $region159: #{tpu_custom_call.1} parent=156 // pred_check_branch
        %275 = sbr.rel (%p272) target = $region161
      $region160: #{tpu_custom_call.1} parent=156 // pred_region
        %s290 = sand.u32 1, 7
        %p291 = scmp.eq.s32.totalorder %s290, 0
        %p292 = pneg %p291
        // Predicated region
        $region173: #{tpu_custom_call.1} parent=160 // pred_check
          _
        $region174: #{tpu_custom_call.1} parent=160 // pred_check_branch
          %294 = sbr.rel (%p291) target = $region176
        $region175: #{tpu_custom_call.1} parent=160 // pred_region
          %s295 = sand.u32 1, 7
          %s296 = ssub.s32 1, %s295
          %s297 = scalar_lea.vmem %s269, %s296
          %s298 = ssub.s32 1, %s295
          %s299 = scalar_lea.vmem %s270, %s298 [#allocation5]
          %s300 = sshllo.u32 0, %s295
          loop: start=0, step=1, limit=1
          $region177: #{tpu_custom_call.1} parent=175 // loop_pre_header
            _
          $region178: #{tpu_custom_call.1} parent=175 // loop_header
            %s302 = sphi 0, %s306
            %p303 = scmp.ge.s32.totalorder %s302, 1
            %s307 = sphi %s297, %s297
            %s308 = sphi %s299, %s299
          $region179: #{tpu_custom_call.1} parent=175 // loop_header_branch
            %305 = sbr.rel (%p303) target = $region183
          $region180: #{tpu_custom_call.1} parent=175 // loop_body
            %v309 = vld [vmem:[%s307] sm:%s300]
            %310 = vst [vmem:[%s308] sm:%s300] %v309
          $region181: #{tpu_custom_call.1} parent=175 // loop_footer
            %s306 = sadd.s32 1, %s302
          $region182: #{tpu_custom_call.1} parent=175 // loop_footer_branch
            %301 = sbr.rel target = $region178
          $region183: #{tpu_custom_call.1} parent=175 // loop_exit
            _
        $region176: #{tpu_custom_call.1} parent=160 // pred_fallthru
          _
      $region161: #{tpu_custom_call.1} parent=156 // pred_fallthru
        _
      // Predicated region
      $region162: #{tpu_custom_call.1} parent=156 // pred_check
        %p276 = pneg %p272
      $region163: #{tpu_custom_call.1} parent=156 // pred_check_branch
        %278 = sbr.rel (%p276) target = $region165
      $region164: #{tpu_custom_call.1} parent=156 // pred_region
        %s279 = sshllo.u32 0, 1
        loop: start=0, step=1, limit=1
        $region166: #{tpu_custom_call.1} parent=164 // loop_pre_header
          _
        $region167: #{tpu_custom_call.1} parent=164 // loop_header
          %s281 = sphi 0, %s285
          %p282 = scmp.ge.s32.totalorder %s281, 1
          %s286 = sphi %s269, %s269
          %s287 = sphi %s270, %s270
        $region168: #{tpu_custom_call.1} parent=164 // loop_header_branch
          %284 = sbr.rel (%p282) target = $region172
        $region169: #{tpu_custom_call.1} parent=164 // loop_body
          %v288 = vld [vmem:[%s286] sm:%s279]
          %289 = vst [vmem:[%s287] sm:%s279] %v288
        $region170: #{tpu_custom_call.1} parent=164 // loop_footer
          %s285 = sadd.s32 1, %s281
        $region171: #{tpu_custom_call.1} parent=164 // loop_footer_branch
          %280 = sbr.rel target = $region167
        $region172: #{tpu_custom_call.1} parent=164 // loop_exit
          _
      $region165: #{tpu_custom_call.1} parent=156 // pred_fallthru
        _
      // Predicated region
      $region184: #{tpu_custom_call.1} parent=156 // pred_check
        _
      $region185: #{tpu_custom_call.1} parent=156 // pred_check_branch
        %313 = sbr.rel (0) target = $region187
      $region186: #{tpu_custom_call.1} parent=156 // pred_region
        %314 = vsyncadd [#allocation2], 16
      $region187: #{tpu_custom_call.1} parent=156 // pred_fallthru
        _
    $region157: #{tpu_custom_call.1} parent=1 // pred_fallthru
      _
    %p315 = pneg %p265
    // Predicated region
    $region188: #{tpu_custom_call.1} parent=1 // pred_check
      _
    $region189: #{tpu_custom_call.1} parent=1 // pred_check_branch
      %317 = sbr.rel (%p265) target = $region191
    $region190: #{tpu_custom_call.1} parent=1 // pred_region
      %vm318 = vcmask 253952
      %319 = vst.msk [vmem:[#allocation5 + $0x4] sm:$0x1] %vm318, 0.0
    $region191: #{tpu_custom_call.1} parent=1 // pred_fallthru
      _
    %s320 = scalar_select %p265, 1, 0
    %s321 = sadd.s32 %s259, %s320
    %s322 = sadd.s32 %s14, 5
    %s323 = sld [smem:[#allocation4 + %s322]]
    %p324 = scmp.ge.s32.totalorder %s323, 0
    %p325 = scmp.lt.s32.totalorder %s323, 128
    %p326 = pnand %p324, %p325
    %p327 = pneg %p326
    %s328 = scalar_select %p327, %s323, 0
    // Predicated region
    $region192: #{tpu_custom_call.1} parent=1 // pred_check
      _
    $region193: #{tpu_custom_call.1} parent=1 // pred_check_branch
      %330 = sbr.rel (%p326) target = $region195
    $region194: #{tpu_custom_call.1} parent=1 // pred_region
      %s331 = scalar_lea.vmem %s1, %s328
      %s332 = scalar_lea.vmem [#allocation5], 5
      %p334 = scmp.lt.u32.totalorder 1, 8
      %p335 = pneg %p334
      // Predicated region
      $region196: #{tpu_custom_call.1} parent=194 // pred_check
        _
      $region197: #{tpu_custom_call.1} parent=194 // pred_check_branch
        %337 = sbr.rel (%p334) target = $region199
      $region198: #{tpu_custom_call.1} parent=194 // pred_region
        %s352 = sand.u32 1, 7
        %p353 = scmp.eq.s32.totalorder %s352, 0
        %p354 = pneg %p353
        // Predicated region
        $region211: #{tpu_custom_call.1} parent=198 // pred_check
          _
        $region212: #{tpu_custom_call.1} parent=198 // pred_check_branch
          %356 = sbr.rel (%p353) target = $region214
        $region213: #{tpu_custom_call.1} parent=198 // pred_region
          %s357 = sand.u32 1, 7
          %s358 = ssub.s32 1, %s357
          %s359 = scalar_lea.vmem %s331, %s358
          %s360 = ssub.s32 1, %s357
          %s361 = scalar_lea.vmem %s332, %s360 [#allocation5]
          %s362 = sshllo.u32 0, %s357
          loop: start=0, step=1, limit=1
          $region215: #{tpu_custom_call.1} parent=213 // loop_pre_header
            _
          $region216: #{tpu_custom_call.1} parent=213 // loop_header
            %s364 = sphi 0, %s368
            %p365 = scmp.ge.s32.totalorder %s364, 1
            %s369 = sphi %s359, %s359
            %s370 = sphi %s361, %s361
          $region217: #{tpu_custom_call.1} parent=213 // loop_header_branch
            %367 = sbr.rel (%p365) target = $region221
          $region218: #{tpu_custom_call.1} parent=213 // loop_body
            %v371 = vld [vmem:[%s369] sm:%s362]
            %372 = vst [vmem:[%s370] sm:%s362] %v371
          $region219: #{tpu_custom_call.1} parent=213 // loop_footer
            %s368 = sadd.s32 1, %s364
          $region220: #{tpu_custom_call.1} parent=213 // loop_footer_branch
            %363 = sbr.rel target = $region216
          $region221: #{tpu_custom_call.1} parent=213 // loop_exit
            _
        $region214: #{tpu_custom_call.1} parent=198 // pred_fallthru
          _
      $region199: #{tpu_custom_call.1} parent=194 // pred_fallthru
        _
      // Predicated region
      $region200: #{tpu_custom_call.1} parent=194 // pred_check
        %p338 = pneg %p334
      $region201: #{tpu_custom_call.1} parent=194 // pred_check_branch
        %340 = sbr.rel (%p338) target = $region203
      $region202: #{tpu_custom_call.1} parent=194 // pred_region
        %s341 = sshllo.u32 0, 1
        loop: start=0, step=1, limit=1
        $region204: #{tpu_custom_call.1} parent=202 // loop_pre_header
          _
        $region205: #{tpu_custom_call.1} parent=202 // loop_header
          %s343 = sphi 0, %s347
          %p344 = scmp.ge.s32.totalorder %s343, 1
          %s348 = sphi %s331, %s331
          %s349 = sphi %s332, %s332
        $region206: #{tpu_custom_call.1} parent=202 // loop_header_branch
          %346 = sbr.rel (%p344) target = $region210
        $region207: #{tpu_custom_call.1} parent=202 // loop_body
          %v350 = vld [vmem:[%s348] sm:%s341]
          %351 = vst [vmem:[%s349] sm:%s341] %v350
        $region208: #{tpu_custom_call.1} parent=202 // loop_footer
          %s347 = sadd.s32 1, %s343
        $region209: #{tpu_custom_call.1} parent=202 // loop_footer_branch
          %342 = sbr.rel target = $region205
        $region210: #{tpu_custom_call.1} parent=202 // loop_exit
          _
      $region203: #{tpu_custom_call.1} parent=194 // pred_fallthru
        _
      // Predicated region
      $region222: #{tpu_custom_call.1} parent=194 // pred_check
        _
      $region223: #{tpu_custom_call.1} parent=194 // pred_check_branch
        %375 = sbr.rel (0) target = $region225
      $region224: #{tpu_custom_call.1} parent=194 // pred_region
        %376 = vsyncadd [#allocation2], 16
      $region225: #{tpu_custom_call.1} parent=194 // pred_fallthru
        _
    $region195: #{tpu_custom_call.1} parent=1 // pred_fallthru
      _
    %p377 = pneg %p327
    // Predicated region
    $region226: #{tpu_custom_call.1} parent=1 // pred_check
      _
    $region227: #{tpu_custom_call.1} parent=1 // pred_check_branch
      %379 = sbr.rel (%p327) target = $region229
    $region228: #{tpu_custom_call.1} parent=1 // pred_region
      %vm380 = vcmask 253952
      %381 = vst.msk [vmem:[#allocation5 + $0x5] sm:$0x1] %vm380, 0.0
    $region229: #{tpu_custom_call.1} parent=1 // pred_fallthru
      _
    %s382 = scalar_select %p327, 1, 0
    %s383 = sadd.s32 %s321, %s382
    %s384 = sadd.s32 %s14, 6
    %s385 = sld [smem:[#allocation4 + %s384]]
    %p386 = scmp.ge.s32.totalorder %s385, 0
    %p387 = scmp.lt.s32.totalorder %s385, 128
    %p388 = pnand %p386, %p387
    %p389 = pneg %p388
    %s390 = scalar_select %p389, %s385, 0
    // Predicated region
    $region230: #{tpu_custom_call.1} parent=1 // pred_check
      _
    $region231: #{tpu_custom_call.1} parent=1 // pred_check_branch
      %392 = sbr.rel (%p388) target = $region233
    $region232: #{tpu_custom_call.1} parent=1 // pred_region
      %s393 = scalar_lea.vmem %s1, %s390
      %s394 = scalar_lea.vmem [#allocation5], 6
      %p396 = scmp.lt.u32.totalorder 1, 8
      %p397 = pneg %p396
      // Predicated region
      $region234: #{tpu_custom_call.1} parent=232 // pred_check
        _
      $region235: #{tpu_custom_call.1} parent=232 // pred_check_branch
        %399 = sbr.rel (%p396) target = $region237
      $region236: #{tpu_custom_call.1} parent=232 // pred_region
        %s414 = sand.u32 1, 7
        %p415 = scmp.eq.s32.totalorder %s414, 0
        %p416 = pneg %p415
        // Predicated region
        $region249: #{tpu_custom_call.1} parent=236 // pred_check
          _
        $region250: #{tpu_custom_call.1} parent=236 // pred_check_branch
          %418 = sbr.rel (%p415) target = $region252
        $region251: #{tpu_custom_call.1} parent=236 // pred_region
          %s419 = sand.u32 1, 7
          %s420 = ssub.s32 1, %s419
          %s421 = scalar_lea.vmem %s393, %s420
          %s422 = ssub.s32 1, %s419
          %s423 = scalar_lea.vmem %s394, %s422 [#allocation5]
          %s424 = sshllo.u32 0, %s419
          loop: start=0, step=1, limit=1
          $region253: #{tpu_custom_call.1} parent=251 // loop_pre_header
            _
          $region254: #{tpu_custom_call.1} parent=251 // loop_header
            %s426 = sphi 0, %s430
            %p427 = scmp.ge.s32.totalorder %s426, 1
            %s431 = sphi %s421, %s421
            %s432 = sphi %s423, %s423
          $region255: #{tpu_custom_call.1} parent=251 // loop_header_branch
            %429 = sbr.rel (%p427) target = $region259
          $region256: #{tpu_custom_call.1} parent=251 // loop_body
            %v433 = vld [vmem:[%s431] sm:%s424]
            %434 = vst [vmem:[%s432] sm:%s424] %v433
          $region257: #{tpu_custom_call.1} parent=251 // loop_footer
            %s430 = sadd.s32 1, %s426
          $region258: #{tpu_custom_call.1} parent=251 // loop_footer_branch
            %425 = sbr.rel target = $region254
          $region259: #{tpu_custom_call.1} parent=251 // loop_exit
            _
        $region252: #{tpu_custom_call.1} parent=236 // pred_fallthru
          _
      $region237: #{tpu_custom_call.1} parent=232 // pred_fallthru
        _
      // Predicated region
      $region238: #{tpu_custom_call.1} parent=232 // pred_check
        %p400 = pneg %p396
      $region239: #{tpu_custom_call.1} parent=232 // pred_check_branch
        %402 = sbr.rel (%p400) target = $region241
      $region240: #{tpu_custom_call.1} parent=232 // pred_region
        %s403 = sshllo.u32 0, 1
        loop: start=0, step=1, limit=1
        $region242: #{tpu_custom_call.1} parent=240 // loop_pre_header
          _
        $region243: #{tpu_custom_call.1} parent=240 // loop_header
          %s405 = sphi 0, %s409
          %p406 = scmp.ge.s32.totalorder %s405, 1
          %s410 = sphi %s393, %s393
          %s411 = sphi %s394, %s394
        $region244: #{tpu_custom_call.1} parent=240 // loop_header_branch
          %408 = sbr.rel (%p406) target = $region248
        $region245: #{tpu_custom_call.1} parent=240 // loop_body
          %v412 = vld [vmem:[%s410] sm:%s403]
          %413 = vst [vmem:[%s411] sm:%s403] %v412
        $region246: #{tpu_custom_call.1} parent=240 // loop_footer
          %s409 = sadd.s32 1, %s405
        $region247: #{tpu_custom_call.1} parent=240 // loop_footer_branch
          %404 = sbr.rel target = $region243
        $region248: #{tpu_custom_call.1} parent=240 // loop_exit
          _
      $region241: #{tpu_custom_call.1} parent=232 // pred_fallthru
        _
      // Predicated region
      $region260: #{tpu_custom_call.1} parent=232 // pred_check
        _
      $region261: #{tpu_custom_call.1} parent=232 // pred_check_branch
        %437 = sbr.rel (0) target = $region263
      $region262: #{tpu_custom_call.1} parent=232 // pred_region
        %438 = vsyncadd [#allocation2], 16
      $region263: #{tpu_custom_call.1} parent=232 // pred_fallthru
        _
    $region233: #{tpu_custom_call.1} parent=1 // pred_fallthru
      _
    %p439 = pneg %p389
    // Predicated region
    $region264: #{tpu_custom_call.1} parent=1 // pred_check
      _
    $region265: #{tpu_custom_call.1} parent=1 // pred_check_branch
      %441 = sbr.rel (%p389) target = $region267
    $region266: #{tpu_custom_call.1} parent=1 // pred_region
      %vm442 = vcmask 253952
      %443 = vst.msk [vmem:[#allocation5 + $0x6] sm:$0x1] %vm442, 0.0
    $region267: #{tpu_custom_call.1} parent=1 // pred_fallthru
      _
    %s444 = scalar_select %p389, 1, 0
    %s445 = sadd.s32 %s383, %s444
    %s446 = sadd.s32 %s14, 7
    %s447 = sld [smem:[#allocation4 + %s446]]
    %p448 = scmp.ge.s32.totalorder %s447, 0
    %p449 = scmp.lt.s32.totalorder %s447, 128
    %p450 = pnand %p448, %p449
    %p451 = pneg %p450
    %s452 = scalar_select %p451, %s447, 0
    // Predicated region
    $region268: #{tpu_custom_call.1} parent=1 // pred_check
      _
    $region269: #{tpu_custom_call.1} parent=1 // pred_check_branch
      %454 = sbr.rel (%p450) target = $region271
    $region270: #{tpu_custom_call.1} parent=1 // pred_region
      %s455 = scalar_lea.vmem %s1, %s452
      %s456 = scalar_lea.vmem [#allocation5], 7
      %p458 = scmp.lt.u32.totalorder 1, 8
      %p459 = pneg %p458
      // Predicated region
      $region272: #{tpu_custom_call.1} parent=270 // pred_check
        _
      $region273: #{tpu_custom_call.1} parent=270 // pred_check_branch
        %461 = sbr.rel (%p458) target = $region275
      $region274: #{tpu_custom_call.1} parent=270 // pred_region
        %s476 = sand.u32 1, 7
        %p477 = scmp.eq.s32.totalorder %s476, 0
        %p478 = pneg %p477
        // Predicated region
        $region287: #{tpu_custom_call.1} parent=274 // pred_check
          _
        $region288: #{tpu_custom_call.1} parent=274 // pred_check_branch
          %480 = sbr.rel (%p477) target = $region290
        $region289: #{tpu_custom_call.1} parent=274 // pred_region
          %s481 = sand.u32 1, 7
          %s482 = ssub.s32 1, %s481
          %s483 = scalar_lea.vmem %s455, %s482
          %s484 = ssub.s32 1, %s481
          %s485 = scalar_lea.vmem %s456, %s484 [#allocation5]
          %s486 = sshllo.u32 0, %s481
          loop: start=0, step=1, limit=1
          $region291: #{tpu_custom_call.1} parent=289 // loop_pre_header
            _
          $region292: #{tpu_custom_call.1} parent=289 // loop_header
            %s488 = sphi 0, %s492
            %p489 = scmp.ge.s32.totalorder %s488, 1
            %s493 = sphi %s483, %s483
            %s494 = sphi %s485, %s485
          $region293: #{tpu_custom_call.1} parent=289 // loop_header_branch
            %491 = sbr.rel (%p489) target = $region297
          $region294: #{tpu_custom_call.1} parent=289 // loop_body
            %v495 = vld [vmem:[%s493] sm:%s486]
            %496 = vst [vmem:[%s494] sm:%s486] %v495
          $region295: #{tpu_custom_call.1} parent=289 // loop_footer
            %s492 = sadd.s32 1, %s488
          $region296: #{tpu_custom_call.1} parent=289 // loop_footer_branch
            %487 = sbr.rel target = $region292
          $region297: #{tpu_custom_call.1} parent=289 // loop_exit
            _
        $region290: #{tpu_custom_call.1} parent=274 // pred_fallthru
          _
      $region275: #{tpu_custom_call.1} parent=270 // pred_fallthru
        _
      // Predicated region
      $region276: #{tpu_custom_call.1} parent=270 // pred_check
        %p462 = pneg %p458
      $region277: #{tpu_custom_call.1} parent=270 // pred_check_branch
        %464 = sbr.rel (%p462) target = $region279
      $region278: #{tpu_custom_call.1} parent=270 // pred_region
        %s465 = sshllo.u32 0, 1
        loop: start=0, step=1, limit=1
        $region280: #{tpu_custom_call.1} parent=278 // loop_pre_header
          _
        $region281: #{tpu_custom_call.1} parent=278 // loop_header
          %s467 = sphi 0, %s471
          %p468 = scmp.ge.s32.totalorder %s467, 1
          %s472 = sphi %s455, %s455
          %s473 = sphi %s456, %s456
        $region282: #{tpu_custom_call.1} parent=278 // loop_header_branch
          %470 = sbr.rel (%p468) target = $region286
        $region283: #{tpu_custom_call.1} parent=278 // loop_body
          %v474 = vld [vmem:[%s472] sm:%s465]
          %475 = vst [vmem:[%s473] sm:%s465] %v474
        $region284: #{tpu_custom_call.1} parent=278 // loop_footer
          %s471 = sadd.s32 1, %s467
        $region285: #{tpu_custom_call.1} parent=278 // loop_footer_branch
          %466 = sbr.rel target = $region281
        $region286: #{tpu_custom_call.1} parent=278 // loop_exit
          _
      $region279: #{tpu_custom_call.1} parent=270 // pred_fallthru
        _
      // Predicated region
      $region298: #{tpu_custom_call.1} parent=270 // pred_check
        _
      $region299: #{tpu_custom_call.1} parent=270 // pred_check_branch
        %499 = sbr.rel (0) target = $region301
      $region300: #{tpu_custom_call.1} parent=270 // pred_region
        %500 = vsyncadd [#allocation2], 16
      $region301: #{tpu_custom_call.1} parent=270 // pred_fallthru
        _
    $region271: #{tpu_custom_call.1} parent=1 // pred_fallthru
      _
    %p501 = pneg %p451
    // Predicated region
    $region302: #{tpu_custom_call.1} parent=1 // pred_check
      _
    $region303: #{tpu_custom_call.1} parent=1 // pred_check_branch
      %503 = sbr.rel (%p451) target = $region305
    $region304: #{tpu_custom_call.1} parent=1 // pred_region
      %vm504 = vcmask 253952
      %505 = vst.msk [vmem:[#allocation5 + $0x7] sm:$0x1] %vm504, 0.0
    $region305: #{tpu_custom_call.1} parent=1 // pred_fallthru
      _
    %s506 = scalar_select %p451, 1, 0
    %s507 = sadd.s32 %s445, %s506
    %s508 = sadd.s32 %s14, 8
    %s509 = sld [smem:[#allocation4 + %s508]]
    %p510 = scmp.ge.s32.totalorder %s509, 0
    %p511 = scmp.lt.s32.totalorder %s509, 128
    %p512 = pnand %p510, %p511
    %p513 = pneg %p512
    %s514 = scalar_select %p513, %s509, 0
    // Predicated region
    $region306: #{tpu_custom_call.1} parent=1 // pred_check
      _
    $region307: #{tpu_custom_call.1} parent=1 // pred_check_branch
      %516 = sbr.rel (%p512) target = $region309
    $region308: #{tpu_custom_call.1} parent=1 // pred_region
      %s517 = scalar_lea.vmem %s1, %s514
      %s518 = scalar_lea.vmem [#allocation5], 8
      %p520 = scmp.lt.u32.totalorder 1, 8
      %p521 = pneg %p520
      // Predicated region
      $region310: #{tpu_custom_call.1} parent=308 // pred_check
        _
      $region311: #{tpu_custom_call.1} parent=308 // pred_check_branch
        %523 = sbr.rel (%p520) target = $region313
      $region312: #{tpu_custom_call.1} parent=308 // pred_region
        %s538 = sand.u32 1, 7
        %p539 = scmp.eq.s32.totalorder %s538, 0
        %p540 = pneg %p539
        // Predicated region
        $region325: #{tpu_custom_call.1} parent=312 // pred_check
          _
        $region326: #{tpu_custom_call.1} parent=312 // pred_check_branch
          %542 = sbr.rel (%p539) target = $region328
        $region327: #{tpu_custom_call.1} parent=312 // pred_region
          %s543 = sand.u32 1, 7
          %s544 = ssub.s32 1, %s543
          %s545 = scalar_lea.vmem %s517, %s544
          %s546 = ssub.s32 1, %s543
          %s547 = scalar_lea.vmem %s518, %s546 [#allocation5]
          %s548 = sshllo.u32 0, %s543
          loop: start=0, step=1, limit=1
          $region329: #{tpu_custom_call.1} parent=327 // loop_pre_header
            _
          $region330: #{tpu_custom_call.1} parent=327 // loop_header
            %s550 = sphi 0, %s554
            %p551 = scmp.ge.s32.totalorder %s550, 1
            %s555 = sphi %s545, %s545
            %s556 = sphi %s547, %s547
          $region331: #{tpu_custom_call.1} parent=327 // loop_header_branch
            %553 = sbr.rel (%p551) target = $region335
          $region332: #{tpu_custom_call.1} parent=327 // loop_body
            %v557 = vld [vmem:[%s555] sm:%s548]
            %558 = vst [vmem:[%s556] sm:%s548] %v557
          $region333: #{tpu_custom_call.1} parent=327 // loop_footer
            %s554 = sadd.s32 1, %s550
          $region334: #{tpu_custom_call.1} parent=327 // loop_footer_branch
            %549 = sbr.rel target = $region330
          $region335: #{tpu_custom_call.1} parent=327 // loop_exit
            _
        $region328: #{tpu_custom_call.1} parent=312 // pred_fallthru
          _
      $region313: #{tpu_custom_call.1} parent=308 // pred_fallthru
        _
      // Predicated region
      $region314: #{tpu_custom_call.1} parent=308 // pred_check
        %p524 = pneg %p520
      $region315: #{tpu_custom_call.1} parent=308 // pred_check_branch
        %526 = sbr.rel (%p524) target = $region317
      $region316: #{tpu_custom_call.1} parent=308 // pred_region
        %s527 = sshllo.u32 0, 1
        loop: start=0, step=1, limit=1
        $region318: #{tpu_custom_call.1} parent=316 // loop_pre_header
          _
        $region319: #{tpu_custom_call.1} parent=316 // loop_header
          %s529 = sphi 0, %s533
          %p530 = scmp.ge.s32.totalorder %s529, 1
          %s534 = sphi %s517, %s517
          %s535 = sphi %s518, %s518
        $region320: #{tpu_custom_call.1} parent=316 // loop_header_branch
          %532 = sbr.rel (%p530) target = $region324
        $region321: #{tpu_custom_call.1} parent=316 // loop_body
          %v536 = vld [vmem:[%s534] sm:%s527]
          %537 = vst [vmem:[%s535] sm:%s527] %v536
        $region322: #{tpu_custom_call.1} parent=316 // loop_footer
          %s533 = sadd.s32 1, %s529
        $region323: #{tpu_custom_call.1} parent=316 // loop_footer_branch
          %528 = sbr.rel target = $region319
        $region324: #{tpu_custom_call.1} parent=316 // loop_exit
          _
      $region317: #{tpu_custom_call.1} parent=308 // pred_fallthru
        _
      // Predicated region
      $region336: #{tpu_custom_call.1} parent=308 // pred_check
        _
      $region337: #{tpu_custom_call.1} parent=308 // pred_check_branch
        %561 = sbr.rel (0) target = $region339
      $region338: #{tpu_custom_call.1} parent=308 // pred_region
        %562 = vsyncadd [#allocation2], 16
      $region339: #{tpu_custom_call.1} parent=308 // pred_fallthru
        _
    $region309: #{tpu_custom_call.1} parent=1 // pred_fallthru
      _
    %p563 = pneg %p513
    // Predicated region
    $region340: #{tpu_custom_call.1} parent=1 // pred_check
      _
    $region341: #{tpu_custom_call.1} parent=1 // pred_check_branch
      %565 = sbr.rel (%p513) target = $region343
    $region342: #{tpu_custom_call.1} parent=1 // pred_region
      %vm566 = vcmask 253952
      %567 = vst.msk [vmem:[#allocation5 + $0x8] sm:$0x1] %vm566, 0.0
    $region343: #{tpu_custom_call.1} parent=1 // pred_fallthru
      _
    %s568 = scalar_select %p513, 1, 0
    %s569 = sadd.s32 %s507, %s568
    %s570 = sadd.s32 %s14, 9
    %s571 = sld [smem:[#allocation4 + %s570]]
    %p572 = scmp.ge.s32.totalorder %s571, 0
    %p573 = scmp.lt.s32.totalorder %s571, 128
    %p574 = pnand %p572, %p573
    %p575 = pneg %p574
    %s576 = scalar_select %p575, %s571, 0
    // Predicated region
    $region344: #{tpu_custom_call.1} parent=1 // pred_check
      _
    $region345: #{tpu_custom_call.1} parent=1 // pred_check_branch
      %578 = sbr.rel (%p574) target = $region347
    $region346: #{tpu_custom_call.1} parent=1 // pred_region
      %s579 = scalar_lea.vmem %s1, %s576
      %s580 = scalar_lea.vmem [#allocation5], 9
      %p582 = scmp.lt.u32.totalorder 1, 8
      %p583 = pneg %p582
      // Predicated region
      $region348: #{tpu_custom_call.1} parent=346 // pred_check
        _
      $region349: #{tpu_custom_call.1} parent=346 // pred_check_branch
        %585 = sbr.rel (%p582) target = $region351
      $region350: #{tpu_custom_call.1} parent=346 // pred_region
        %s600 = sand.u32 1, 7
        %p601 = scmp.eq.s32.totalorder %s600, 0
        %p602 = pneg %p601
        // Predicated region
        $region363: #{tpu_custom_call.1} parent=350 // pred_check
          _
        $region364: #{tpu_custom_call.1} parent=350 // pred_check_branch
          %604 = sbr.rel (%p601) target = $region366
        $region365: #{tpu_custom_call.1} parent=350 // pred_region
          %s605 = sand.u32 1, 7
          %s606 = ssub.s32 1, %s605
          %s607 = scalar_lea.vmem %s579, %s606
          %s608 = ssub.s32 1, %s605
          %s609 = scalar_lea.vmem %s580, %s608 [#allocation5]
          %s610 = sshllo.u32 0, %s605
          loop: start=0, step=1, limit=1
          $region367: #{tpu_custom_call.1} parent=365 // loop_pre_header
            _
          $region368: #{tpu_custom_call.1} parent=365 // loop_header
            %s612 = sphi 0, %s616
            %p613 = scmp.ge.s32.totalorder %s612, 1
            %s617 = sphi %s607, %s607
            %s618 = sphi %s609, %s609
          $region369: #{tpu_custom_call.1} parent=365 // loop_header_branch
            %615 = sbr.rel (%p613) target = $region373
          $region370: #{tpu_custom_call.1} parent=365 // loop_body
            %v619 = vld [vmem:[%s617] sm:%s610]
            %620 = vst [vmem:[%s618] sm:%s610] %v619
          $region371: #{tpu_custom_call.1} parent=365 // loop_footer
            %s616 = sadd.s32 1, %s612
          $region372: #{tpu_custom_call.1} parent=365 // loop_footer_branch
            %611 = sbr.rel target = $region368
          $region373: #{tpu_custom_call.1} parent=365 // loop_exit
            _
        $region366: #{tpu_custom_call.1} parent=350 // pred_fallthru
          _
      $region351: #{tpu_custom_call.1} parent=346 // pred_fallthru
        _
      // Predicated region
      $region352: #{tpu_custom_call.1} parent=346 // pred_check
        %p586 = pneg %p582
      $region353: #{tpu_custom_call.1} parent=346 // pred_check_branch
        %588 = sbr.rel (%p586) target = $region355
      $region354: #{tpu_custom_call.1} parent=346 // pred_region
        %s589 = sshllo.u32 0, 1
        loop: start=0, step=1, limit=1
        $region356: #{tpu_custom_call.1} parent=354 // loop_pre_header
          _
        $region357: #{tpu_custom_call.1} parent=354 // loop_header
          %s591 = sphi 0, %s595
          %p592 = scmp.ge.s32.totalorder %s591, 1
          %s596 = sphi %s579, %s579
          %s597 = sphi %s580, %s580
        $region358: #{tpu_custom_call.1} parent=354 // loop_header_branch
          %594 = sbr.rel (%p592) target = $region362
        $region359: #{tpu_custom_call.1} parent=354 // loop_body
          %v598 = vld [vmem:[%s596] sm:%s589]
          %599 = vst [vmem:[%s597] sm:%s589] %v598
        $region360: #{tpu_custom_call.1} parent=354 // loop_footer
          %s595 = sadd.s32 1, %s591
        $region361: #{tpu_custom_call.1} parent=354 // loop_footer_branch
          %590 = sbr.rel target = $region357
        $region362: #{tpu_custom_call.1} parent=354 // loop_exit
          _
      $region355: #{tpu_custom_call.1} parent=346 // pred_fallthru
        _
      // Predicated region
      $region374: #{tpu_custom_call.1} parent=346 // pred_check
        _
      $region375: #{tpu_custom_call.1} parent=346 // pred_check_branch
        %623 = sbr.rel (0) target = $region377
      $region376: #{tpu_custom_call.1} parent=346 // pred_region
        %624 = vsyncadd [#allocation2], 16
      $region377: #{tpu_custom_call.1} parent=346 // pred_fallthru
        _
    $region347: #{tpu_custom_call.1} parent=1 // pred_fallthru
      _
    %p625 = pneg %p575
    // Predicated region
    $region378: #{tpu_custom_call.1} parent=1 // pred_check
      _
    $region379: #{tpu_custom_call.1} parent=1 // pred_check_branch
      %627 = sbr.rel (%p575) target = $region381
    $region380: #{tpu_custom_call.1} parent=1 // pred_region
      %vm628 = vcmask 253952
      %629 = vst.msk [vmem:[#allocation5 + $0x9] sm:$0x1] %vm628, 0.0
    $region381: #{tpu_custom_call.1} parent=1 // pred_fallthru
      _
    %s630 = scalar_select %p575, 1, 0
    %s631 = sadd.s32 %s569, %s630
    %s632 = sadd.s32 %s14, 10
    %s633 = sld [smem:[#allocation4 + %s632]]
    %p634 = scmp.ge.s32.totalorder %s633, 0
    %p635 = scmp.lt.s32.totalorder %s633, 128
    %p636 = pnand %p634, %p635
    %p637 = pneg %p636
    %s638 = scalar_select %p637, %s633, 0
    // Predicated region
    $region382: #{tpu_custom_call.1} parent=1 // pred_check
      _
    $region383: #{tpu_custom_call.1} parent=1 // pred_check_branch
      %640 = sbr.rel (%p636) target = $region385
    $region384: #{tpu_custom_call.1} parent=1 // pred_region
      %s641 = scalar_lea.vmem %s1, %s638
      %s642 = scalar_lea.vmem [#allocation5], 10
      %p644 = scmp.lt.u32.totalorder 1, 8
      %p645 = pneg %p644
      // Predicated region
      $region386: #{tpu_custom_call.1} parent=384 // pred_check
        _
      $region387: #{tpu_custom_call.1} parent=384 // pred_check_branch
        %647 = sbr.rel (%p644) target = $region389
      $region388: #{tpu_custom_call.1} parent=384 // pred_region
        %s662 = sand.u32 1, 7
        %p663 = scmp.eq.s32.totalorder %s662, 0
        %p664 = pneg %p663
        // Predicated region
        $region401: #{tpu_custom_call.1} parent=388 // pred_check
          _
        $region402: #{tpu_custom_call.1} parent=388 // pred_check_branch
          %666 = sbr.rel (%p663) target = $region404
        $region403: #{tpu_custom_call.1} parent=388 // pred_region
          %s667 = sand.u32 1, 7
          %s668 = ssub.s32 1, %s667
          %s669 = scalar_lea.vmem %s641, %s668
          %s670 = ssub.s32 1, %s667
          %s671 = scalar_lea.vmem %s642, %s670 [#allocation5]
          %s672 = sshllo.u32 0, %s667
          loop: start=0, step=1, limit=1
          $region405: #{tpu_custom_call.1} parent=403 // loop_pre_header
            _
          $region406: #{tpu_custom_call.1} parent=403 // loop_header
            %s674 = sphi 0, %s678
            %p675 = scmp.ge.s32.totalorder %s674, 1
            %s679 = sphi %s669, %s669
            %s680 = sphi %s671, %s671
          $region407: #{tpu_custom_call.1} parent=403 // loop_header_branch
            %677 = sbr.rel (%p675) target = $region411
          $region408: #{tpu_custom_call.1} parent=403 // loop_body
            %v681 = vld [vmem:[%s679] sm:%s672]
            %682 = vst [vmem:[%s680] sm:%s672] %v681
          $region409: #{tpu_custom_call.1} parent=403 // loop_footer
            %s678 = sadd.s32 1, %s674
          $region410: #{tpu_custom_call.1} parent=403 // loop_footer_branch
            %673 = sbr.rel target = $region406
          $region411: #{tpu_custom_call.1} parent=403 // loop_exit
            _
        $region404: #{tpu_custom_call.1} parent=388 // pred_fallthru
          _
      $region389: #{tpu_custom_call.1} parent=384 // pred_fallthru
        _
      // Predicated region
      $region390: #{tpu_custom_call.1} parent=384 // pred_check
        %p648 = pneg %p644
      $region391: #{tpu_custom_call.1} parent=384 // pred_check_branch
        %650 = sbr.rel (%p648) target = $region393
      $region392: #{tpu_custom_call.1} parent=384 // pred_region
        %s651 = sshllo.u32 0, 1
        loop: start=0, step=1, limit=1
        $region394: #{tpu_custom_call.1} parent=392 // loop_pre_header
          _
        $region395: #{tpu_custom_call.1} parent=392 // loop_header
          %s653 = sphi 0, %s657
          %p654 = scmp.ge.s32.totalorder %s653, 1
          %s658 = sphi %s641, %s641
          %s659 = sphi %s642, %s642
        $region396: #{tpu_custom_call.1} parent=392 // loop_header_branch
          %656 = sbr.rel (%p654) target = $region400
        $region397: #{tpu_custom_call.1} parent=392 // loop_body
          %v660 = vld [vmem:[%s658] sm:%s651]
          %661 = vst [vmem:[%s659] sm:%s651] %v660
        $region398: #{tpu_custom_call.1} parent=392 // loop_footer
          %s657 = sadd.s32 1, %s653
        $region399: #{tpu_custom_call.1} parent=392 // loop_footer_branch
          %652 = sbr.rel target = $region395
        $region400: #{tpu_custom_call.1} parent=392 // loop_exit
          _
      $region393: #{tpu_custom_call.1} parent=384 // pred_fallthru
        _
      // Predicated region
      $region412: #{tpu_custom_call.1} parent=384 // pred_check
        _
      $region413: #{tpu_custom_call.1} parent=384 // pred_check_branch
        %685 = sbr.rel (0) target = $region415
      $region414: #{tpu_custom_call.1} parent=384 // pred_region
        %686 = vsyncadd [#allocation2], 16
      $region415: #{tpu_custom_call.1} parent=384 // pred_fallthru
        _
    $region385: #{tpu_custom_call.1} parent=1 // pred_fallthru
      _
    %p687 = pneg %p637
    // Predicated region
    $region416: #{tpu_custom_call.1} parent=1 // pred_check
      _
    $region417: #{tpu_custom_call.1} parent=1 // pred_check_branch
      %689 = sbr.rel (%p637) target = $region419
    $region418: #{tpu_custom_call.1} parent=1 // pred_region
      %vm690 = vcmask 253952
      %691 = vst.msk [vmem:[#allocation5 + $0xa] sm:$0x1] %vm690, 0.0
    $region419: #{tpu_custom_call.1} parent=1 // pred_fallthru
      _
    %s692 = scalar_select %p637, 1, 0
    %s693 = sadd.s32 %s631, %s692
    %s694 = sadd.s32 %s14, 11
    %s695 = sld [smem:[#allocation4 + %s694]]
    %p696 = scmp.ge.s32.totalorder %s695, 0
    %p697 = scmp.lt.s32.totalorder %s695, 128
    %p698 = pnand %p696, %p697
    %p699 = pneg %p698
    %s700 = scalar_select %p699, %s695, 0
    // Predicated region
    $region420: #{tpu_custom_call.1} parent=1 // pred_check
      _
    $region421: #{tpu_custom_call.1} parent=1 // pred_check_branch
      %702 = sbr.rel (%p698) target = $region423
    $region422: #{tpu_custom_call.1} parent=1 // pred_region
      %s703 = scalar_lea.vmem %s1, %s700
      %s704 = scalar_lea.vmem [#allocation5], 11
      %p706 = scmp.lt.u32.totalorder 1, 8
      %p707 = pneg %p706
      // Predicated region
      $region424: #{tpu_custom_call.1} parent=422 // pred_check
        _
      $region425: #{tpu_custom_call.1} parent=422 // pred_check_branch
        %709 = sbr.rel (%p706) target = $region427
      $region426: #{tpu_custom_call.1} parent=422 // pred_region
        %s724 = sand.u32 1, 7
        %p725 = scmp.eq.s32.totalorder %s724, 0
        %p726 = pneg %p725
        // Predicated region
        $region439: #{tpu_custom_call.1} parent=426 // pred_check
          _
        $region440: #{tpu_custom_call.1} parent=426 // pred_check_branch
          %728 = sbr.rel (%p725) target = $region442
        $region441: #{tpu_custom_call.1} parent=426 // pred_region
          %s729 = sand.u32 1, 7
          %s730 = ssub.s32 1, %s729
          %s731 = scalar_lea.vmem %s703, %s730
          %s732 = ssub.s32 1, %s729
          %s733 = scalar_lea.vmem %s704, %s732 [#allocation5]
          %s734 = sshllo.u32 0, %s729
          loop: start=0, step=1, limit=1
          $region443: #{tpu_custom_call.1} parent=441 // loop_pre_header
            _
          $region444: #{tpu_custom_call.1} parent=441 // loop_header
            %s736 = sphi 0, %s740
            %p737 = scmp.ge.s32.totalorder %s736, 1
            %s741 = sphi %s731, %s731
            %s742 = sphi %s733, %s733
          $region445: #{tpu_custom_call.1} parent=441 // loop_header_branch
            %739 = sbr.rel (%p737) target = $region449
          $region446: #{tpu_custom_call.1} parent=441 // loop_body
            %v743 = vld [vmem:[%s741] sm:%s734]
            %744 = vst [vmem:[%s742] sm:%s734] %v743
          $region447: #{tpu_custom_call.1} parent=441 // loop_footer
            %s740 = sadd.s32 1, %s736
          $region448: #{tpu_custom_call.1} parent=441 // loop_footer_branch
            %735 = sbr.rel target = $region444
          $region449: #{tpu_custom_call.1} parent=441 // loop_exit
            _
        $region442: #{tpu_custom_call.1} parent=426 // pred_fallthru
          _
      $region427: #{tpu_custom_call.1} parent=422 // pred_fallthru
        _
      // Predicated region
      $region428: #{tpu_custom_call.1} parent=422 // pred_check
        %p710 = pneg %p706
      $region429: #{tpu_custom_call.1} parent=422 // pred_check_branch
        %712 = sbr.rel (%p710) target = $region431
      $region430: #{tpu_custom_call.1} parent=422 // pred_region
        %s713 = sshllo.u32 0, 1
        loop: start=0, step=1, limit=1
        $region432: #{tpu_custom_call.1} parent=430 // loop_pre_header
          _
        $region433: #{tpu_custom_call.1} parent=430 // loop_header
          %s715 = sphi 0, %s719
          %p716 = scmp.ge.s32.totalorder %s715, 1
          %s720 = sphi %s703, %s703
          %s721 = sphi %s704, %s704
        $region434: #{tpu_custom_call.1} parent=430 // loop_header_branch
          %718 = sbr.rel (%p716) target = $region438
        $region435: #{tpu_custom_call.1} parent=430 // loop_body
          %v722 = vld [vmem:[%s720] sm:%s713]
          %723 = vst [vmem:[%s721] sm:%s713] %v722
        $region436: #{tpu_custom_call.1} parent=430 // loop_footer
          %s719 = sadd.s32 1, %s715
        $region437: #{tpu_custom_call.1} parent=430 // loop_footer_branch
          %714 = sbr.rel target = $region433
        $region438: #{tpu_custom_call.1} parent=430 // loop_exit
          _
      $region431: #{tpu_custom_call.1} parent=422 // pred_fallthru
        _
      // Predicated region
      $region450: #{tpu_custom_call.1} parent=422 // pred_check
        _
      $region451: #{tpu_custom_call.1} parent=422 // pred_check_branch
        %747 = sbr.rel (0) target = $region453
      $region452: #{tpu_custom_call.1} parent=422 // pred_region
        %748 = vsyncadd [#allocation2], 16
      $region453: #{tpu_custom_call.1} parent=422 // pred_fallthru
        _
    $region423: #{tpu_custom_call.1} parent=1 // pred_fallthru
      _
    %p749 = pneg %p699
    // Predicated region
    $region454: #{tpu_custom_call.1} parent=1 // pred_check
      _
    $region455: #{tpu_custom_call.1} parent=1 // pred_check_branch
      %751 = sbr.rel (%p699) target = $region457
    $region456: #{tpu_custom_call.1} parent=1 // pred_region
      %vm752 = vcmask 253952
      %753 = vst.msk [vmem:[#allocation5 + $0xb] sm:$0x1] %vm752, 0.0
    $region457: #{tpu_custom_call.1} parent=1 // pred_fallthru
      _
    %s754 = scalar_select %p699, 1, 0
    %s755 = sadd.s32 %s693, %s754
    %s756 = sadd.s32 %s14, 12
    %s757 = sld [smem:[#allocation4 + %s756]]
    %p758 = scmp.ge.s32.totalorder %s757, 0
    %p759 = scmp.lt.s32.totalorder %s757, 128
    %p760 = pnand %p758, %p759
    %p761 = pneg %p760
    %s762 = scalar_select %p761, %s757, 0
    // Predicated region
    $region458: #{tpu_custom_call.1} parent=1 // pred_check
      _
    $region459: #{tpu_custom_call.1} parent=1 // pred_check_branch
      %764 = sbr.rel (%p760) target = $region461
    $region460: #{tpu_custom_call.1} parent=1 // pred_region
      %s765 = scalar_lea.vmem %s1, %s762
      %s766 = scalar_lea.vmem [#allocation5], 12
      %p768 = scmp.lt.u32.totalorder 1, 8
      %p769 = pneg %p768
      // Predicated region
      $region462: #{tpu_custom_call.1} parent=460 // pred_check
        _
      $region463: #{tpu_custom_call.1} parent=460 // pred_check_branch
        %771 = sbr.rel (%p768) target = $region465
      $region464: #{tpu_custom_call.1} parent=460 // pred_region
        %s786 = sand.u32 1, 7
        %p787 = scmp.eq.s32.totalorder %s786, 0
        %p788 = pneg %p787
        // Predicated region
        $region477: #{tpu_custom_call.1} parent=464 // pred_check
          _
        $region478: #{tpu_custom_call.1} parent=464 // pred_check_branch
          %790 = sbr.rel (%p787) target = $region480
        $region479: #{tpu_custom_call.1} parent=464 // pred_region
          %s791 = sand.u32 1, 7
          %s792 = ssub.s32 1, %s791
          %s793 = scalar_lea.vmem %s765, %s792
          %s794 = ssub.s32 1, %s791
          %s795 = scalar_lea.vmem %s766, %s794 [#allocation5]
          %s796 = sshllo.u32 0, %s791
          loop: start=0, step=1, limit=1
          $region481: #{tpu_custom_call.1} parent=479 // loop_pre_header
            _
          $region482: #{tpu_custom_call.1} parent=479 // loop_header
            %s798 = sphi 0, %s802
            %p799 = scmp.ge.s32.totalorder %s798, 1
            %s803 = sphi %s793, %s793
            %s804 = sphi %s795, %s795
          $region483: #{tpu_custom_call.1} parent=479 // loop_header_branch
            %801 = sbr.rel (%p799) target = $region487
          $region484: #{tpu_custom_call.1} parent=479 // loop_body
            %v805 = vld [vmem:[%s803] sm:%s796]
            %806 = vst [vmem:[%s804] sm:%s796] %v805
          $region485: #{tpu_custom_call.1} parent=479 // loop_footer
            %s802 = sadd.s32 1, %s798
          $region486: #{tpu_custom_call.1} parent=479 // loop_footer_branch
            %797 = sbr.rel target = $region482
          $region487: #{tpu_custom_call.1} parent=479 // loop_exit
            _
        $region480: #{tpu_custom_call.1} parent=464 // pred_fallthru
          _
      $region465: #{tpu_custom_call.1} parent=460 // pred_fallthru
        _
      // Predicated region
      $region466: #{tpu_custom_call.1} parent=460 // pred_check
        %p772 = pneg %p768
      $region467: #{tpu_custom_call.1} parent=460 // pred_check_branch
        %774 = sbr.rel (%p772) target = $region469
      $region468: #{tpu_custom_call.1} parent=460 // pred_region
        %s775 = sshllo.u32 0, 1
        loop: start=0, step=1, limit=1
        $region470: #{tpu_custom_call.1} parent=468 // loop_pre_header
          _
        $region471: #{tpu_custom_call.1} parent=468 // loop_header
          %s777 = sphi 0, %s781
          %p778 = scmp.ge.s32.totalorder %s777, 1
          %s782 = sphi %s765, %s765
          %s783 = sphi %s766, %s766
        $region472: #{tpu_custom_call.1} parent=468 // loop_header_branch
          %780 = sbr.rel (%p778) target = $region476
        $region473: #{tpu_custom_call.1} parent=468 // loop_body
          %v784 = vld [vmem:[%s782] sm:%s775]
          %785 = vst [vmem:[%s783] sm:%s775] %v784
        $region474: #{tpu_custom_call.1} parent=468 // loop_footer
          %s781 = sadd.s32 1, %s777
        $region475: #{tpu_custom_call.1} parent=468 // loop_footer_branch
          %776 = sbr.rel target = $region471
        $region476: #{tpu_custom_call.1} parent=468 // loop_exit
          _
      $region469: #{tpu_custom_call.1} parent=460 // pred_fallthru
        _
      // Predicated region
      $region488: #{tpu_custom_call.1} parent=460 // pred_check
        _
      $region489: #{tpu_custom_call.1} parent=460 // pred_check_branch
        %809 = sbr.rel (0) target = $region491
      $region490: #{tpu_custom_call.1} parent=460 // pred_region
        %810 = vsyncadd [#allocation2], 16
      $region491: #{tpu_custom_call.1} parent=460 // pred_fallthru
        _
    $region461: #{tpu_custom_call.1} parent=1 // pred_fallthru
      _
    %p811 = pneg %p761
    // Predicated region
    $region492: #{tpu_custom_call.1} parent=1 // pred_check
      _
    $region493: #{tpu_custom_call.1} parent=1 // pred_check_branch
      %813 = sbr.rel (%p761) target = $region495
    $region494: #{tpu_custom_call.1} parent=1 // pred_region
      %vm814 = vcmask 253952
      %815 = vst.msk [vmem:[#allocation5 + $0xc] sm:$0x1] %vm814, 0.0
    $region495: #{tpu_custom_call.1} parent=1 // pred_fallthru
      _
    %s816 = scalar_select %p761, 1, 0
    %s817 = sadd.s32 %s755, %s816
    %s818 = sadd.s32 %s14, 13
    %s819 = sld [smem:[#allocation4 + %s818]]
    %p820 = scmp.ge.s32.totalorder %s819, 0
    %p821 = scmp.lt.s32.totalorder %s819, 128
    %p822 = pnand %p820, %p821
    %p823 = pneg %p822
    %s824 = scalar_select %p823, %s819, 0
    // Predicated region
    $region496: #{tpu_custom_call.1} parent=1 // pred_check
      _
    $region497: #{tpu_custom_call.1} parent=1 // pred_check_branch
      %826 = sbr.rel (%p822) target = $region499
    $region498: #{tpu_custom_call.1} parent=1 // pred_region
      %s827 = scalar_lea.vmem %s1, %s824
      %s828 = scalar_lea.vmem [#allocation5], 13
      %p830 = scmp.lt.u32.totalorder 1, 8
      %p831 = pneg %p830
      // Predicated region
      $region500: #{tpu_custom_call.1} parent=498 // pred_check
        _
      $region501: #{tpu_custom_call.1} parent=498 // pred_check_branch
        %833 = sbr.rel (%p830) target = $region503
      $region502: #{tpu_custom_call.1} parent=498 // pred_region
        %s848 = sand.u32 1, 7
        %p849 = scmp.eq.s32.totalorder %s848, 0
        %p850 = pneg %p849
        // Predicated region
        $region515: #{tpu_custom_call.1} parent=502 // pred_check
          _
        $region516: #{tpu_custom_call.1} parent=502 // pred_check_branch
          %852 = sbr.rel (%p849) target = $region518
        $region517: #{tpu_custom_call.1} parent=502 // pred_region
          %s853 = sand.u32 1, 7
          %s854 = ssub.s32 1, %s853
          %s855 = scalar_lea.vmem %s827, %s854
          %s856 = ssub.s32 1, %s853
          %s857 = scalar_lea.vmem %s828, %s856 [#allocation5]
          %s858 = sshllo.u32 0, %s853
          loop: start=0, step=1, limit=1
          $region519: #{tpu_custom_call.1} parent=517 // loop_pre_header
            _
          $region520: #{tpu_custom_call.1} parent=517 // loop_header
            %s860 = sphi 0, %s864
            %p861 = scmp.ge.s32.totalorder %s860, 1
            %s865 = sphi %s855, %s855
            %s866 = sphi %s857, %s857
          $region521: #{tpu_custom_call.1} parent=517 // loop_header_branch
            %863 = sbr.rel (%p861) target = $region525
          $region522: #{tpu_custom_call.1} parent=517 // loop_body
            %v867 = vld [vmem:[%s865] sm:%s858]
            %868 = vst [vmem:[%s866] sm:%s858] %v867
          $region523: #{tpu_custom_call.1} parent=517 // loop_footer
            %s864 = sadd.s32 1, %s860
          $region524: #{tpu_custom_call.1} parent=517 // loop_footer_branch
            %859 = sbr.rel target = $region520
          $region525: #{tpu_custom_call.1} parent=517 // loop_exit
            _
        $region518: #{tpu_custom_call.1} parent=502 // pred_fallthru
          _
      $region503: #{tpu_custom_call.1} parent=498 // pred_fallthru
        _
      // Predicated region
      $region504: #{tpu_custom_call.1} parent=498 // pred_check
        %p834 = pneg %p830
      $region505: #{tpu_custom_call.1} parent=498 // pred_check_branch
        %836 = sbr.rel (%p834) target = $region507
      $region506: #{tpu_custom_call.1} parent=498 // pred_region
        %s837 = sshllo.u32 0, 1
        loop: start=0, step=1, limit=1
        $region508: #{tpu_custom_call.1} parent=506 // loop_pre_header
          _
        $region509: #{tpu_custom_call.1} parent=506 // loop_header
          %s839 = sphi 0, %s843
          %p840 = scmp.ge.s32.totalorder %s839, 1
          %s844 = sphi %s827, %s827
          %s845 = sphi %s828, %s828
        $region510: #{tpu_custom_call.1} parent=506 // loop_header_branch
          %842 = sbr.rel (%p840) target = $region514
        $region511: #{tpu_custom_call.1} parent=506 // loop_body
          %v846 = vld [vmem:[%s844] sm:%s837]
          %847 = vst [vmem:[%s845] sm:%s837] %v846
        $region512: #{tpu_custom_call.1} parent=506 // loop_footer
          %s843 = sadd.s32 1, %s839
        $region513: #{tpu_custom_call.1} parent=506 // loop_footer_branch
          %838 = sbr.rel target = $region509
        $region514: #{tpu_custom_call.1} parent=506 // loop_exit
          _
      $region507: #{tpu_custom_call.1} parent=498 // pred_fallthru
        _
      // Predicated region
      $region526: #{tpu_custom_call.1} parent=498 // pred_check
        _
      $region527: #{tpu_custom_call.1} parent=498 // pred_check_branch
        %871 = sbr.rel (0) target = $region529
      $region528: #{tpu_custom_call.1} parent=498 // pred_region
        %872 = vsyncadd [#allocation2], 16
      $region529: #{tpu_custom_call.1} parent=498 // pred_fallthru
        _
    $region499: #{tpu_custom_call.1} parent=1 // pred_fallthru
      _
    %p873 = pneg %p823
    // Predicated region
    $region530: #{tpu_custom_call.1} parent=1 // pred_check
      _
    $region531: #{tpu_custom_call.1} parent=1 // pred_check_branch
      %875 = sbr.rel (%p823) target = $region533
    $region532: #{tpu_custom_call.1} parent=1 // pred_region
      %vm876 = vcmask 253952
      %877 = vst.msk [vmem:[#allocation5 + $0xd] sm:$0x1] %vm876, 0.0
    $region533: #{tpu_custom_call.1} parent=1 // pred_fallthru
      _
    %s878 = scalar_select %p823, 1, 0
    %s879 = sadd.s32 %s817, %s878
    %s880 = sadd.s32 %s14, 14
    %s881 = sld [smem:[#allocation4 + %s880]]
    %p882 = scmp.ge.s32.totalorder %s881, 0
    %p883 = scmp.lt.s32.totalorder %s881, 128
    %p884 = pnand %p882, %p883
    %p885 = pneg %p884
    %s886 = scalar_select %p885, %s881, 0
    // Predicated region
    $region534: #{tpu_custom_call.1} parent=1 // pred_check
      _
    $region535: #{tpu_custom_call.1} parent=1 // pred_check_branch
      %888 = sbr.rel (%p884) target = $region537
    $region536: #{tpu_custom_call.1} parent=1 // pred_region
      %s889 = scalar_lea.vmem %s1, %s886
      %s890 = scalar_lea.vmem [#allocation5], 14
      %p892 = scmp.lt.u32.totalorder 1, 8
      %p893 = pneg %p892
      // Predicated region
      $region538: #{tpu_custom_call.1} parent=536 // pred_check
        _
      $region539: #{tpu_custom_call.1} parent=536 // pred_check_branch
        %895 = sbr.rel (%p892) target = $region541
      $region540: #{tpu_custom_call.1} parent=536 // pred_region
        %s910 = sand.u32 1, 7
        %p911 = scmp.eq.s32.totalorder %s910, 0
        %p912 = pneg %p911
        // Predicated region
        $region553: #{tpu_custom_call.1} parent=540 // pred_check
          _
        $region554: #{tpu_custom_call.1} parent=540 // pred_check_branch
          %914 = sbr.rel (%p911) target = $region556
        $region555: #{tpu_custom_call.1} parent=540 // pred_region
          %s915 = sand.u32 1, 7
          %s916 = ssub.s32 1, %s915
          %s917 = scalar_lea.vmem %s889, %s916
          %s918 = ssub.s32 1, %s915
          %s919 = scalar_lea.vmem %s890, %s918 [#allocation5]
          %s920 = sshllo.u32 0, %s915
          loop: start=0, step=1, limit=1
          $region557: #{tpu_custom_call.1} parent=555 // loop_pre_header
            _
          $region558: #{tpu_custom_call.1} parent=555 // loop_header
            %s922 = sphi 0, %s926
            %p923 = scmp.ge.s32.totalorder %s922, 1
            %s927 = sphi %s917, %s917
            %s928 = sphi %s919, %s919
          $region559: #{tpu_custom_call.1} parent=555 // loop_header_branch
            %925 = sbr.rel (%p923) target = $region563
          $region560: #{tpu_custom_call.1} parent=555 // loop_body
            %v929 = vld [vmem:[%s927] sm:%s920]
            %930 = vst [vmem:[%s928] sm:%s920] %v929
          $region561: #{tpu_custom_call.1} parent=555 // loop_footer
            %s926 = sadd.s32 1, %s922
          $region562: #{tpu_custom_call.1} parent=555 // loop_footer_branch
            %921 = sbr.rel target = $region558
          $region563: #{tpu_custom_call.1} parent=555 // loop_exit
            _
        $region556: #{tpu_custom_call.1} parent=540 // pred_fallthru
          _
      $region541: #{tpu_custom_call.1} parent=536 // pred_fallthru
        _
      // Predicated region
      $region542: #{tpu_custom_call.1} parent=536 // pred_check
        %p896 = pneg %p892
      $region543: #{tpu_custom_call.1} parent=536 // pred_check_branch
        %898 = sbr.rel (%p896) target = $region545
      $region544: #{tpu_custom_call.1} parent=536 // pred_region
        %s899 = sshllo.u32 0, 1
        loop: start=0, step=1, limit=1
        $region546: #{tpu_custom_call.1} parent=544 // loop_pre_header
          _
        $region547: #{tpu_custom_call.1} parent=544 // loop_header
          %s901 = sphi 0, %s905
          %p902 = scmp.ge.s32.totalorder %s901, 1
          %s906 = sphi %s889, %s889
          %s907 = sphi %s890, %s890
        $region548: #{tpu_custom_call.1} parent=544 // loop_header_branch
          %904 = sbr.rel (%p902) target = $region552
        $region549: #{tpu_custom_call.1} parent=544 // loop_body
          %v908 = vld [vmem:[%s906] sm:%s899]
          %909 = vst [vmem:[%s907] sm:%s899] %v908
        $region550: #{tpu_custom_call.1} parent=544 // loop_footer
          %s905 = sadd.s32 1, %s901
        $region551: #{tpu_custom_call.1} parent=544 // loop_footer_branch
          %900 = sbr.rel target = $region547
        $region552: #{tpu_custom_call.1} parent=544 // loop_exit
          _
      $region545: #{tpu_custom_call.1} parent=536 // pred_fallthru
        _
      // Predicated region
      $region564: #{tpu_custom_call.1} parent=536 // pred_check
        _
      $region565: #{tpu_custom_call.1} parent=536 // pred_check_branch
        %933 = sbr.rel (0) target = $region567
      $region566: #{tpu_custom_call.1} parent=536 // pred_region
        %934 = vsyncadd [#allocation2], 16
      $region567: #{tpu_custom_call.1} parent=536 // pred_fallthru
        _
    $region537: #{tpu_custom_call.1} parent=1 // pred_fallthru
      _
    %p935 = pneg %p885
    // Predicated region
    $region568: #{tpu_custom_call.1} parent=1 // pred_check
      _
    $region569: #{tpu_custom_call.1} parent=1 // pred_check_branch
      %937 = sbr.rel (%p885) target = $region571
    $region570: #{tpu_custom_call.1} parent=1 // pred_region
      %vm938 = vcmask 253952
      %939 = vst.msk [vmem:[#allocation5 + $0xe] sm:$0x1] %vm938, 0.0
    $region571: #{tpu_custom_call.1} parent=1 // pred_fallthru
      _
    %s940 = scalar_select %p885, 1, 0
    %s941 = sadd.s32 %s879, %s940
    %s942 = sadd.s32 %s14, 15
    %s943 = sld [smem:[#allocation4 + %s942]]
    %p944 = scmp.ge.s32.totalorder %s943, 0
    %p945 = scmp.lt.s32.totalorder %s943, 128
    %p946 = pnand %p944, %p945
    %p947 = pneg %p946
    %s948 = scalar_select %p947, %s943, 0
    // Predicated region
    $region572: #{tpu_custom_call.1} parent=1 // pred_check
      _
    $region573: #{tpu_custom_call.1} parent=1 // pred_check_branch
      %950 = sbr.rel (%p946) target = $region575
    $region574: #{tpu_custom_call.1} parent=1 // pred_region
      %s951 = scalar_lea.vmem %s1, %s948
      %s952 = scalar_lea.vmem [#allocation5], 15
      %p954 = scmp.lt.u32.totalorder 1, 8
      %p955 = pneg %p954
      // Predicated region
      $region576: #{tpu_custom_call.1} parent=574 // pred_check
        _
      $region577: #{tpu_custom_call.1} parent=574 // pred_check_branch
        %957 = sbr.rel (%p954) target = $region579
      $region578: #{tpu_custom_call.1} parent=574 // pred_region
        %s972 = sand.u32 1, 7
        %p973 = scmp.eq.s32.totalorder %s972, 0
        %p974 = pneg %p973
        // Predicated region
        $region591: #{tpu_custom_call.1} parent=578 // pred_check
          _
        $region592: #{tpu_custom_call.1} parent=578 // pred_check_branch
          %976 = sbr.rel (%p973) target = $region594
        $region593: #{tpu_custom_call.1} parent=578 // pred_region
          %s977 = sand.u32 1, 7
          %s978 = ssub.s32 1, %s977
          %s979 = scalar_lea.vmem %s951, %s978
          %s980 = ssub.s32 1, %s977
          %s981 = scalar_lea.vmem %s952, %s980 [#allocation5]
          %s982 = sshllo.u32 0, %s977
          loop: start=0, step=1, limit=1
          $region595: #{tpu_custom_call.1} parent=593 // loop_pre_header
            _
          $region596: #{tpu_custom_call.1} parent=593 // loop_header
            %s984 = sphi 0, %s988
            %p985 = scmp.ge.s32.totalorder %s984, 1
            %s989 = sphi %s979, %s979
            %s990 = sphi %s981, %s981
          $region597: #{tpu_custom_call.1} parent=593 // loop_header_branch
            %987 = sbr.rel (%p985) target = $region601
          $region598: #{tpu_custom_call.1} parent=593 // loop_body
            %v991 = vld [vmem:[%s989] sm:%s982]
            %992 = vst [vmem:[%s990] sm:%s982] %v991
          $region599: #{tpu_custom_call.1} parent=593 // loop_footer
            %s988 = sadd.s32 1, %s984
          $region600: #{tpu_custom_call.1} parent=593 // loop_footer_branch
            %983 = sbr.rel target = $region596
          $region601: #{tpu_custom_call.1} parent=593 // loop_exit
            _
        $region594: #{tpu_custom_call.1} parent=578 // pred_fallthru
          _
      $region579: #{tpu_custom_call.1} parent=574 // pred_fallthru
        _
      // Predicated region
      $region580: #{tpu_custom_call.1} parent=574 // pred_check
        %p958 = pneg %p954
      $region581: #{tpu_custom_call.1} parent=574 // pred_check_branch
        %960 = sbr.rel (%p958) target = $region583
      $region582: #{tpu_custom_call.1} parent=574 // pred_region
        %s961 = sshllo.u32 0, 1
        loop: start=0, step=1, limit=1
        $region584: #{tpu_custom_call.1} parent=582 // loop_pre_header
          _
        $region585: #{tpu_custom_call.1} parent=582 // loop_header
          %s963 = sphi 0, %s967
          %p964 = scmp.ge.s32.totalorder %s963, 1
          %s968 = sphi %s951, %s951
          %s969 = sphi %s952, %s952
        $region586: #{tpu_custom_call.1} parent=582 // loop_header_branch
          %966 = sbr.rel (%p964) target = $region590
        $region587: #{tpu_custom_call.1} parent=582 // loop_body
          %v970 = vld [vmem:[%s968] sm:%s961]
          %971 = vst [vmem:[%s969] sm:%s961] %v970
        $region588: #{tpu_custom_call.1} parent=582 // loop_footer
          %s967 = sadd.s32 1, %s963
        $region589: #{tpu_custom_call.1} parent=582 // loop_footer_branch
          %962 = sbr.rel target = $region585
        $region590: #{tpu_custom_call.1} parent=582 // loop_exit
          _
      $region583: #{tpu_custom_call.1} parent=574 // pred_fallthru
        _
      // Predicated region
      $region602: #{tpu_custom_call.1} parent=574 // pred_check
        _
      $region603: #{tpu_custom_call.1} parent=574 // pred_check_branch
        %995 = sbr.rel (0) target = $region605
      $region604: #{tpu_custom_call.1} parent=574 // pred_region
        %996 = vsyncadd [#allocation2], 16
      $region605: #{tpu_custom_call.1} parent=574 // pred_fallthru
        _
    $region575: #{tpu_custom_call.1} parent=1 // pred_fallthru
      _
    %p997 = pneg %p947
    // Predicated region
    $region606: #{tpu_custom_call.1} parent=1 // pred_check
      _
    $region607: #{tpu_custom_call.1} parent=1 // pred_check_branch
      %999 = sbr.rel (%p947) target = $region609
    $region608: #{tpu_custom_call.1} parent=1 // pred_region
      %vm1000 = vcmask 253952
      %1001 = vst.msk [vmem:[#allocation5 + $0xf] sm:$0x1] %vm1000, 0.0
    $region609: #{tpu_custom_call.1} parent=1 // pred_fallthru
      _
    %s1002 = scalar_select %p947, 1, 0
    %s1003 = sadd.s32 %s941, %s1002
    %p1004 = scmp.gt.s32.totalorder %s1003, 0
    // Predicated region
    $region610: #{tpu_custom_call.1} parent=1 // pred_check
      %p1005 = pneg %p1004
    $region611: #{tpu_custom_call.1} parent=1 // pred_check_branch
      %1007 = sbr.rel (%p1005) target = $region613
    $region612: #{tpu_custom_call.1} parent=1 // pred_region
      %s1008 = smul.u32 1, 1
      %s1009 = sshll.u32 %s1008, 4
      %1010 = dma.done [#allocation2], %s1009
    $region613: #{tpu_custom_call.1} parent=1 // pred_fallthru
      _
    %p1011 = scmp.gt.s32.totalorder %s1003, 1
    // Predicated region
    $region614: #{tpu_custom_call.1} parent=1 // pred_check
      %p1012 = pneg %p1011
    $region615: #{tpu_custom_call.1} parent=1 // pred_check_branch
      %1014 = sbr.rel (%p1012) target = $region617
    $region616: #{tpu_custom_call.1} parent=1 // pred_region
      %s1015 = smul.u32 1, 1
      %s1016 = sshll.u32 %s1015, 4
      %1017 = dma.done [#allocation2], %s1016
    $region617: #{tpu_custom_call.1} parent=1 // pred_fallthru
      _
    %p1018 = scmp.gt.s32.totalorder %s1003, 2
    // Predicated region
    $region618: #{tpu_custom_call.1} parent=1 // pred_check
      %p1019 = pneg %p1018
    $region619: #{tpu_custom_call.1} parent=1 // pred_check_branch
      %1021 = sbr.rel (%p1019) target = $region621
    $region620: #{tpu_custom_call.1} parent=1 // pred_region
      %s1022 = smul.u32 1, 1
      %s1023 = sshll.u32 %s1022, 4
      %1024 = dma.done [#allocation2], %s1023
    $region621: #{tpu_custom_call.1} parent=1 // pred_fallthru
      _
    %p1025 = scmp.gt.s32.totalorder %s1003, 3
    // Predicated region
    $region622: #{tpu_custom_call.1} parent=1 // pred_check
      %p1026 = pneg %p1025
    $region623: #{tpu_custom_call.1} parent=1 // pred_check_branch
      %1028 = sbr.rel (%p1026) target = $region625
    $region624: #{tpu_custom_call.1} parent=1 // pred_region
      %s1029 = smul.u32 1, 1
      %s1030 = sshll.u32 %s1029, 4
      %1031 = dma.done [#allocation2], %s1030
    $region625: #{tpu_custom_call.1} parent=1 // pred_fallthru
      _
    %p1032 = scmp.gt.s32.totalorder %s1003, 4
    // Predicated region
    $region626: #{tpu_custom_call.1} parent=1 // pred_check
      %p1033 = pneg %p1032
    $region627: #{tpu_custom_call.1} parent=1 // pred_check_branch
      %1035 = sbr.rel (%p1033) target = $region629
    $region628: #{tpu_custom_call.1} parent=1 // pred_region
      %s1036 = smul.u32 1, 1
      %s1037 = sshll.u32 %s1036, 4
      %1038 = dma.done [#allocation2], %s1037
    $region629: #{tpu_custom_call.1} parent=1 // pred_fallthru
      _
    %p1039 = scmp.gt.s32.totalorder %s1003, 5
    // Predicated region
    $region630: #{tpu_custom_call.1} parent=1 // pred_check
      %p1040 = pneg %p1039
    $region631: #{tpu_custom_call.1} parent=1 // pred_check_branch
      %1042 = sbr.rel (%p1040) target = $region633
    $region632: #{tpu_custom_call.1} parent=1 // pred_region
      %s1043 = smul.u32 1, 1
      %s1044 = sshll.u32 %s1043, 4
      %1045 = dma.done [#allocation2], %s1044
    $region633: #{tpu_custom_call.1} parent=1 // pred_fallthru
      _
    %p1046 = scmp.gt.s32.totalorder %s1003, 6
    // Predicated region
    $region634: #{tpu_custom_call.1} parent=1 // pred_check
      %p1047 = pneg %p1046
    $region635: #{tpu_custom_call.1} parent=1 // pred_check_branch
      %1049 = sbr.rel (%p1047) target = $region637
    $region636: #{tpu_custom_call.1} parent=1 // pred_region
      %s1050 = smul.u32 1, 1
      %s1051 = sshll.u32 %s1050, 4
      %1052 = dma.done [#allocation2], %s1051
    $region637: #{tpu_custom_call.1} parent=1 // pred_fallthru
      _
    %p1053 = scmp.gt.s32.totalorder %s1003, 7
    // Predicated region
    $region638: #{tpu_custom_call.1} parent=1 // pred_check
      %p1054 = pneg %p1053
    $region639: #{tpu_custom_call.1} parent=1 // pred_check_branch
      %1056 = sbr.rel (%p1054) target = $region641
    $region640: #{tpu_custom_call.1} parent=1 // pred_region
      %s1057 = smul.u32 1, 1
      %s1058 = sshll.u32 %s1057, 4
      %1059 = dma.done [#allocation2], %s1058
    $region641: #{tpu_custom_call.1} parent=1 // pred_fallthru
      _
    %p1060 = scmp.gt.s32.totalorder %s1003, 8
    // Predicated region
    $region642: #{tpu_custom_call.1} parent=1 // pred_check
      %p1061 = pneg %p1060
    $region643: #{tpu_custom_call.1} parent=1 // pred_check_branch
      %1063 = sbr.rel (%p1061) target = $region645
    $region644: #{tpu_custom_call.1} parent=1 // pred_region
      %s1064 = smul.u32 1, 1
      %s1065 = sshll.u32 %s1064, 4
      %1066 = dma.done [#allocation2], %s1065
    $region645: #{tpu_custom_call.1} parent=1 // pred_fallthru
      _
    %p1067 = scmp.gt.s32.totalorder %s1003, 9
    // Predicated region
    $region646: #{tpu_custom_call.1} parent=1 // pred_check
      %p1068 = pneg %p1067
    $region647: #{tpu_custom_call.1} parent=1 // pred_check_branch
      %1070 = sbr.rel (%p1068) target = $region649
    $region648: #{tpu_custom_call.1} parent=1 // pred_region
      %s1071 = smul.u32 1, 1
      %s1072 = sshll.u32 %s1071, 4
      %1073 = dma.done [#allocation2], %s1072
    $region649: #{tpu_custom_call.1} parent=1 // pred_fallthru
      _
    %p1074 = scmp.gt.s32.totalorder %s1003, 10
    // Predicated region
    $region650: #{tpu_custom_call.1} parent=1 // pred_check
      %p1075 = pneg %p1074
    $region651: #{tpu_custom_call.1} parent=1 // pred_check_branch
      %1077 = sbr.rel (%p1075) target = $region653
    $region652: #{tpu_custom_call.1} parent=1 // pred_region
      %s1078 = smul.u32 1, 1
      %s1079 = sshll.u32 %s1078, 4
      %1080 = dma.done [#allocation2], %s1079
    $region653: #{tpu_custom_call.1} parent=1 // pred_fallthru
      _
    %p1081 = scmp.gt.s32.totalorder %s1003, 11
    // Predicated region
    $region654: #{tpu_custom_call.1} parent=1 // pred_check
      %p1082 = pneg %p1081
    $region655: #{tpu_custom_call.1} parent=1 // pred_check_branch
      %1084 = sbr.rel (%p1082) target = $region657
    $region656: #{tpu_custom_call.1} parent=1 // pred_region
      %s1085 = smul.u32 1, 1
      %s1086 = sshll.u32 %s1085, 4
      %1087 = dma.done [#allocation2], %s1086
    $region657: #{tpu_custom_call.1} parent=1 // pred_fallthru
      _
    %p1088 = scmp.gt.s32.totalorder %s1003, 12
    // Predicated region
    $region658: #{tpu_custom_call.1} parent=1 // pred_check
      %p1089 = pneg %p1088
    $region659: #{tpu_custom_call.1} parent=1 // pred_check_branch
      %1091 = sbr.rel (%p1089) target = $region661
    $region660: #{tpu_custom_call.1} parent=1 // pred_region
      %s1092 = smul.u32 1, 1
      %s1093 = sshll.u32 %s1092, 4
      %1094 = dma.done [#allocation2], %s1093
    $region661: #{tpu_custom_call.1} parent=1 // pred_fallthru
      _
    %p1095 = scmp.gt.s32.totalorder %s1003, 13
    // Predicated region
    $region662: #{tpu_custom_call.1} parent=1 // pred_check
      %p1096 = pneg %p1095
    $region663: #{tpu_custom_call.1} parent=1 // pred_check_branch
      %1098 = sbr.rel (%p1096) target = $region665
    $region664: #{tpu_custom_call.1} parent=1 // pred_region
      %s1099 = smul.u32 1, 1
      %s1100 = sshll.u32 %s1099, 4
      %1101 = dma.done [#allocation2], %s1100
    $region665: #{tpu_custom_call.1} parent=1 // pred_fallthru
      _
    %p1102 = scmp.gt.s32.totalorder %s1003, 14
    // Predicated region
    $region666: #{tpu_custom_call.1} parent=1 // pred_check
      %p1103 = pneg %p1102
    $region667: #{tpu_custom_call.1} parent=1 // pred_check_branch
      %1105 = sbr.rel (%p1103) target = $region669
    $region668: #{tpu_custom_call.1} parent=1 // pred_region
      %s1106 = smul.u32 1, 1
      %s1107 = sshll.u32 %s1106, 4
      %1108 = dma.done [#allocation2], %s1107
    $region669: #{tpu_custom_call.1} parent=1 // pred_fallthru
      _
    %p1109 = scmp.gt.s32.totalorder %s1003, 15
    // Predicated region
    $region670: #{tpu_custom_call.1} parent=1 // pred_check
      %p1110 = pneg %p1109
    $region671: #{tpu_custom_call.1} parent=1 // pred_check_branch
      %1112 = sbr.rel (%p1110) target = $region673
    $region672: #{tpu_custom_call.1} parent=1 // pred_region
      %s1113 = smul.u32 1, 1
      %s1114 = sshll.u32 %s1113, 4
      %1115 = dma.done [#allocation2], %s1114
    $region673: #{tpu_custom_call.1} parent=1 // pred_fallthru
      _
    // Predicated region
    $region674: #{tpu_custom_call.1} parent=1 // pred_check
      _
    $region675: #{tpu_custom_call.1} parent=1 // pred_check_branch
      %1117 = sbr.rel (0) target = $region677
    $region676: #{tpu_custom_call.1} parent=1 // pred_region
      %s1119 = ssub.s32 256, 256
      %1120 = vsyncadd [#allocation6], %s1119
      %s1121 = sshll.u32 [#allocation5], 4
      %s1122 = int_to_ptr.vmem [resolvable:$true] %s1121
      %1127 = dma.vmem_to_hbm [thread:$0]  %s1122, 256, %s2, [#allocation6], 128, 128, 8
    $region677: #{tpu_custom_call.1} parent=1 // pred_fallthru
      _
    // Predicated region
    $region678: #{tpu_custom_call.1} parent=1 // pred_check
      _
    $region679: #{tpu_custom_call.1} parent=1 // pred_check_branch
      %1129 = sbr.rel (0) target = $region681
    $region680: #{tpu_custom_call.1} parent=1 // pred_region
      %1130 = dma.done [#allocation6], 256
    $region681: #{tpu_custom_call.1} parent=1 // pred_fallthru
      _
    %1131 = vsyncpa [#allocation6], 1
  %1132 = vsyncmov [#allocation2]
  %s1133 = vpop.sfrf %1132
  %p1134 = scmp.eq.s32.totalorder %s1133, 0
  %p1135 = pneg %p1134
  %1137 = shalt.err (%p1135)

</llo_original>
